<compile_context>
chip_gen: v5e
topology: v5e:2x2
jax: 0.10.0
libtpu: 0.0.40
codegen_flags: <defaults>
</compile_context>

<pallas_src>
import functools

import jax
import jax.numpy as jnp
from jax.experimental import pallas as pl
from jax.experimental.pallas import tpu as pltpu


# ----------------------------------------------------------------------------
# Pallas kernel: fused 3x3 conv + folded BatchNorm (+ ReLU)
# ----------------------------------------------------------------------------
def _conv3x3_bn_act_kernel(xp_ref, w_ref, b_ref, o_ref, *, relu):
    """One (batch, row-band, Cout-tile) step of a same-padded 3x3 conv.

    xp_ref: (1, 1, th+2, W+2, Cin)  bf16 padded input band (1px halo)
    w_ref : (9*Cin, tCo)            bf16 BN-folded weights, K ordered (kh,kw,ci)
    b_ref : (1, tCo)                f32  BN-folded bias
    o_ref : (1, th*W, tCo)          lane-dense output tile
    """
    th = xp_ref.shape[2] - 2
    w = xp_ref.shape[3] - 2
    cin = xp_ref.shape[4]
    tco = o_ref.shape[2]

    xp = xp_ref[0, 0]                                        # (th+2, W+2, Cin)
    taps = [xp[kh:kh + th, kw:kw + w, :].reshape(th * w, cin)
            for kh in range(3) for kw in range(3)]

    if cin % 128 == 0:
        # Lane-aligned Cin: fuse all 9 taps into a single MXU matmul, K=9*Cin.
        patch = jnp.concatenate(taps, axis=-1)               # (th*W, 9*Cin)
        acc = jnp.dot(patch, w_ref[...], preferred_element_type=jnp.float32)
    else:
        # Unaligned Cin: 9 accumulating matmuls (taps still built from the
        # VMEM-resident band, so no extra HBM traffic).
        acc = jnp.zeros((th * w, tco), jnp.float32)
        for k in range(9):
            acc = acc + jnp.dot(taps[k], w_ref[k * cin:(k + 1) * cin, :],
                                preferred_element_type=jnp.float32)

    acc = acc + b_ref[...]                                   # (1, tCo) broadcast
    if relu:
        acc = jnp.maximum(acc, 0.0)
    o_ref[0] = acc.astype(o_ref.dtype)


# ----------------------------------------------------------------------------
# Tiling / VMEM sizing helpers
# ----------------------------------------------------------------------------
def _vmem_limit_bytes():
    """Scoped-VMEM cap: ~3/4 of physical (96 MiB on v5e/v6e, 48 MiB on v7x)."""
    try:
        cap = pltpu.get_tpu_info().vmem_capacity_bytes
        return int(min(96 * 2 ** 20, cap * 3 // 4))
    except Exception:
        return 64 * 2 ** 20


def _pick_row_tile(h, w, cin, tco, budget):
    """Largest divisor of h whose per-step working set fits `budget` bytes."""
    for th in range(h, 0, -1):
        if h % th:
            continue
        band = 2 * (th + 2) * (w + 2) * cin * 2    # bf16 input band, dbl-buffered
        patch = 9 * th * w * cin * 2               # bf16 in-kernel patch matrix
        wgt = 2 * 9 * cin * tco * 2                # bf16 weight tile, dbl-buffered
        outb = 2 * th * w * tco * 4                # f32 acc + output tile
        if band + patch + wgt + outb <= budget:
            return th
    return 1


# ----------------------------------------------------------------------------
# Pallas wrapper: 3x3 conv + folded BN (+ ReLU)
# ----------------------------------------------------------------------------
def conv3x3_bn_relu(x, w9, bias, *, relu=True, out_dtype=jnp.float32):
    """x: (N,H,W,Cin); w9: (9,Cin,Cout) BN-folded; bias: (Cout,).  Same padding."""
    n, h, w, cin = x.shape
    cout = w9.shape[2]
    tco = 128 if cout % 128 == 0 else cout

    vmem_limit = _vmem_limit_bytes()
    th = _pick_row_tile(h, w, cin, tco, budget=vmem_limit // 4)
    nrb = h // th

    xp = jnp.pad(x.astype(jnp.bfloat16), ((0, 0), (1, 1), (1, 1), (0, 0)))
    if nrb == 1:
        xb = xp[:, None]                                 # (N, 1, H+2, W+2, Cin)
    else:
        # Overlapping row bands (2-row halo) so each grid step sees its full
        # 3x3 receptive field without re-reading the whole plane.
        xb = jnp.stack([xp[:, r * th:r * th + th + 2] for r in range(nrb)],
                       axis=1)                           # (N, nrb, th+2, W+2, Cin)

    wk = w9.reshape(9 * cin, cout).astype(jnp.bfloat16)  # K ordered (kh, kw, ci)
    b2 = bias.reshape(1, cout).astype(jnp.float32)

    out = pl.pallas_call(
        functools.partial(_conv3x3_bn_act_kernel, relu=relu),
        out_shape=jax.ShapeDtypeStruct((n, h * w, cout), out_dtype),
        grid=(n, nrb, cout // tco),
        in_specs=[
            pl.BlockSpec((1, 1, th + 2, w + 2, cin), lambda b, r, j: (b, r, 0, 0, 0)),
            pl.BlockSpec((9 * cin, tco), lambda b, r, j: (0, j)),
            pl.BlockSpec((1, tco), lambda b, r, j: (0, j)),
        ],
        out_specs=pl.BlockSpec((1, th * w, tco), lambda b, r, j: (b, r, j)),
        compiler_params=pltpu.CompilerParams(
            dimension_semantics=("parallel", "parallel", "parallel"),
            vmem_limit_bytes=vmem_limit,
        ),
    )(xb, wk, b2)
    return out.reshape(n, h, w, cout)


# ----------------------------------------------------------------------------
# `Down` forward:  MaxPool2d(2) -> DoubleConv(Cin, Cout)
# ----------------------------------------------------------------------------
def down_forward(params, x_nchw):
    x = jnp.transpose(x_nchw, (0, 2, 3, 1)).astype(jnp.float32)   # NCHW -> NHWC
    n, h, w, c = x.shape
    # TODO(synk): 2x2 maxpool kept as one-line XLA glue (negligible bytes/FLOPs
    # vs the convs); all conv hot paths run in Pallas.
    x = x.reshape(n, h // 2, 2, w // 2, 2, c).max(axis=(2, 4))
    (w1, b1), (w2, b2) = params
    x = conv3x3_bn_relu(x, w1, b1, relu=True, out_dtype=jnp.bfloat16)
    x = conv3x3_bn_relu(x, w2, b2, relu=True, out_dtype=jnp.float32)
    return jnp.transpose(x, (0, 3, 1, 2))                         # NHWC -> NCHW


# ----------------------------------------------------------------------------
# Deterministic parameters (BatchNorm folded into conv weights, eval mode)
# ----------------------------------------------------------------------------
def _he_normal(key, shape, fan_in):
    return jax.random.normal(key, shape, jnp.float32) * jnp.sqrt(2.0 / fan_in)


def make_conv_bn(key, cin, cout, eps=1e-5):
    kw, kg, kb, km, kv = jax.random.split(key, 5)
    w = _he_normal(kw, (cout, cin, 3, 3), cin * 9)                # torch OIHW
    gamma = 1.0 + 0.1 * jax.random.normal(kg, (cout,), jnp.float32)
    beta = 0.1 * jax.random.normal(kb, (cout,), jnp.float32)
    mean = 0.1 * jax.random.normal(km, (cout,), jnp.float32)
    var = jax.random.uniform(kv, (cout,), jnp.float32, minval=0.5, maxval=1.5)
    s = gamma * jax.lax.rsqrt(var + eps)
    # OIHW -> (kh, kw, ci, co) -> (9, Cin, Cout), BN scale folded into weights.
    w9 = jnp.transpose(w, (2, 3, 1, 0)).reshape(9, cin, cout) * s[None, None, :]
    bias = beta - mean * s
    return (w9, bias)


def make_down_params(key, cin, cout, cmid=None):
    cmid = cmid if cmid is not None else cout
    k1, k2 = jax.random.split(key)
    return (make_conv_bn(k1, cin, cmid), make_conv_bn(k2, cmid, cout))


# ----------------------------------------------------------------------------
# Pure-JAX f32 reference (same folded weights) for correctness validation
# ----------------------------------------------------------------------------
def _ref_conv3x3(x_nhwc, w9, bias, relu=True):
    k = w9.reshape(3, 3, w9.shape[1], w9.shape[2])                # HWIO
    y = jax.lax.conv_general_dilated(
        x_nhwc, k, window_strides=(1, 1), padding=((1, 1), (1, 1)),
        dimension_numbers=("NHWC", "HWIO", "NHWC"))
    y = y + bias[None, None, None, :]
    return jnp.maximum(y, 0.0) if relu else y


def ref_down(params, x_nchw):
    x = jnp.transpose(x_nchw, (0, 2, 3, 1)).astype(jnp.float32)
    n, h, w, c = x.shape
    x = x.reshape(n, h // 2, 2, w // 2, 2, c).max(axis=(2, 4))
    (w1, b1), (w2, b2) = params
    x = _ref_conv3x3(x, w1, b1)
    x = _ref_conv3x3(x, w2, b2)
    return jnp.transpose(x, (0, 3, 1, 2))


# ----------------------------------------------------------------------------
if __name__ == "__main__":
    key = jax.random.PRNGKey(0)
    pkey, xkey = jax.random.split(key)

    # First Down block of the UNet: Down(64, 128); small spatial size.
    cin, cout = 64, 128
    params = make_down_params(pkey, cin, cout)
    x = jax.random.normal(xkey, (2, cin, 16, 16), jnp.float32)    # NCHW like torch

    fwd = jax.jit(down_forward)
    out = jax.block_until_ready(fwd(params, x))

    assert out.shape == (2, cout, 8, 8), out.shape
    assert out.dtype == jnp.float32
    assert bool(jnp.all(jnp.isfinite(out)))

    # Validate the bf16 Pallas path against the f32 XLA reference.
    ref = jax.block_until_ready(jax.jit(ref_down)(params, x))
    rel_err = float(jnp.max(jnp.abs(out - ref)) / (jnp.max(jnp.abs(ref)) + 1e-6))
    assert rel_err < 5e-2, rel_err

    print("KERNEL_OK")
</pallas_src>

<mosaic_0001>
module attributes {stable_mosaic.version = 11 : i64} {
  func.func @_conv3x3_bn_act_kernel(%arg0: i32, %arg1: i32, %arg2: i32, %arg3: memref<1x1x10x10x64xbf16, #tpu.memory_space<vmem>>, %arg4: memref<576x128xbf16, #tpu.memory_space<vmem>>, %arg5: memref<1x128xf32, #tpu.memory_space<vmem>>, %arg6: memref<1x64x128xbf16, #tpu.memory_space<vmem>>) attributes {dimension_semantics = [#tpu.dimension_semantics<parallel>, #tpu.dimension_semantics<parallel>, #tpu.dimension_semantics<parallel>], iteration_bounds = array<i64: 2, 1, 1>, scalar_prefetch = 0 : i64, scratch_operands = 0 : i64, tpu.core_type = #tpu.core_type<tc>, window_params = [{transform_indices = @transform_0, window_bounds = array<i64: 1, 1, 10, 10, 64>}, {transform_indices = @transform_1, window_bounds = array<i64: 576, 128>}, {transform_indices = @transform_2, window_bounds = array<i64: 1, 128>}, {transform_indices = @transform_3, window_bounds = array<i64: 1, 64, 128>}]} {
    %c0 = arith.constant 0 : index
    %c0_0 = arith.constant 0 : index
    %c0_1 = arith.constant 0 : index
    %c0_2 = arith.constant 0 : index
    %c0_3 = arith.constant 0 : index
    %0 = vector.load %arg3[%c0, %c0_0, %c0_1, %c0_2, %c0_3] : memref<1x1x10x10x64xbf16, #tpu.memory_space<vmem>>, vector<1x1x10x10x64xbf16>
    %1 = vector.shape_cast %0 : vector<1x1x10x10x64xbf16> to vector<10x10x64xbf16>
    %2 = vector.extract_strided_slice %1 {offsets = [0, 0, 0], sizes = [8, 8, 64], strides = [1, 1, 1]} : vector<10x10x64xbf16> to vector<8x8x64xbf16>
    %3 = vector.shape_cast %2 : vector<8x8x64xbf16> to vector<64x64xbf16>
    %4 = vector.extract_strided_slice %1 {offsets = [0, 1, 0], sizes = [8, 8, 64], strides = [1, 1, 1]} : vector<10x10x64xbf16> to vector<8x8x64xbf16>
    %5 = vector.shape_cast %4 : vector<8x8x64xbf16> to vector<64x64xbf16>
    %6 = vector.extract_strided_slice %1 {offsets = [0, 2, 0], sizes = [8, 8, 64], strides = [1, 1, 1]} : vector<10x10x64xbf16> to vector<8x8x64xbf16>
    %7 = vector.shape_cast %6 : vector<8x8x64xbf16> to vector<64x64xbf16>
    %8 = vector.extract_strided_slice %1 {offsets = [1, 0, 0], sizes = [8, 8, 64], strides = [1, 1, 1]} : vector<10x10x64xbf16> to vector<8x8x64xbf16>
    %9 = vector.shape_cast %8 : vector<8x8x64xbf16> to vector<64x64xbf16>
    %10 = vector.extract_strided_slice %1 {offsets = [1, 1, 0], sizes = [8, 8, 64], strides = [1, 1, 1]} : vector<10x10x64xbf16> to vector<8x8x64xbf16>
    %11 = vector.shape_cast %10 : vector<8x8x64xbf16> to vector<64x64xbf16>
    %12 = vector.extract_strided_slice %1 {offsets = [1, 2, 0], sizes = [8, 8, 64], strides = [1, 1, 1]} : vector<10x10x64xbf16> to vector<8x8x64xbf16>
    %13 = vector.shape_cast %12 : vector<8x8x64xbf16> to vector<64x64xbf16>
    %14 = vector.extract_strided_slice %1 {offsets = [2, 0, 0], sizes = [8, 8, 64], strides = [1, 1, 1]} : vector<10x10x64xbf16> to vector<8x8x64xbf16>
    %15 = vector.shape_cast %14 : vector<8x8x64xbf16> to vector<64x64xbf16>
    %16 = vector.extract_strided_slice %1 {offsets = [2, 1, 0], sizes = [8, 8, 64], strides = [1, 1, 1]} : vector<10x10x64xbf16> to vector<8x8x64xbf16>
    %17 = vector.shape_cast %16 : vector<8x8x64xbf16> to vector<64x64xbf16>
    %18 = vector.extract_strided_slice %1 {offsets = [2, 2, 0], sizes = [8, 8, 64], strides = [1, 1, 1]} : vector<10x10x64xbf16> to vector<8x8x64xbf16>
    %19 = vector.shape_cast %18 : vector<8x8x64xbf16> to vector<64x64xbf16>
    %cst = arith.constant 0.000000e+00 : f32
    %20 = vector.broadcast %cst : f32 to vector<64x128xf32>
    %c0_4 = arith.constant 0 : index
    %c0_5 = arith.constant 0 : index
    %21 = vector.load %arg4[%c0_4, %c0_5] : memref<576x128xbf16, #tpu.memory_space<vmem>>, vector<64x128xbf16>
    %cst_6 = arith.constant dense<0.000000e+00> : vector<64x128xf32>
    %22 = tpu.matmul %3, %21, %cst_6 {dimension_numbers = #tpu.dot_dimension_numbers<[1], [0], [0], [1], [0, 0, 1, 1], [], []>} : vector<64x64xbf16>, vector<64x128xbf16>, vector<64x128xf32> -> vector<64x128xf32>
    %23 = arith.addf %20, %22 : vector<64x128xf32>
    %c64 = arith.constant 64 : index
    %c0_7 = arith.constant 0 : index
    %24 = vector.load %arg4[%c64, %c0_7] : memref<576x128xbf16, #tpu.memory_space<vmem>>, vector<64x128xbf16>
    %cst_8 = arith.constant dense<0.000000e+00> : vector<64x128xf32>
    %25 = tpu.matmul %5, %24, %cst_8 {dimension_numbers = #tpu.dot_dimension_numbers<[1], [0], [0], [1], [0, 0, 1, 1], [], []>} : vector<64x64xbf16>, vector<64x128xbf16>, vector<64x128xf32> -> vector<64x128xf32>
    %26 = arith.addf %23, %25 : vector<64x128xf32>
    %c128 = arith.constant 128 : index
    %c0_9 = arith.constant 0 : index
    %27 = vector.load %arg4[%c128, %c0_9] : memref<576x128xbf16, #tpu.memory_space<vmem>>, vector<64x128xbf16>
    %cst_10 = arith.constant dense<0.000000e+00> : vector<64x128xf32>
    %28 = tpu.matmul %7, %27, %cst_10 {dimension_numbers = #tpu.dot_dimension_numbers<[1], [0], [0], [1], [0, 0, 1, 1], [], []>} : vector<64x64xbf16>, vector<64x128xbf16>, vector<64x128xf32> -> vector<64x128xf32>
    %29 = arith.addf %26, %28 : vector<64x128xf32>
    %c192 = arith.constant 192 : index
    %c0_11 = arith.constant 0 : index
    %30 = vector.load %arg4[%c192, %c0_11] : memref<576x128xbf16, #tpu.memory_space<vmem>>, vector<64x128xbf16>
    %cst_12 = arith.constant dense<0.000000e+00> : vector<64x128xf32>
    %31 = tpu.matmul %9, %30, %cst_12 {dimension_numbers = #tpu.dot_dimension_numbers<[1], [0], [0], [1], [0, 0, 1, 1], [], []>} : vector<64x64xbf16>, vector<64x128xbf16>, vector<64x128xf32> -> vector<64x128xf32>
    %32 = arith.addf %29, %31 : vector<64x128xf32>
    %c256 = arith.constant 256 : index
    %c0_13 = arith.constant 0 : index
    %33 = vector.load %arg4[%c256, %c0_13] : memref<576x128xbf16, #tpu.memory_space<vmem>>, vector<64x128xbf16>
    %cst_14 = arith.constant dense<0.000000e+00> : vector<64x128xf32>
    %34 = tpu.matmul %11, %33, %cst_14 {dimension_numbers = #tpu.dot_dimension_numbers<[1], [0], [0], [1], [0, 0, 1, 1], [], []>} : vector<64x64xbf16>, vector<64x128xbf16>, vector<64x128xf32> -> vector<64x128xf32>
    %35 = arith.addf %32, %34 : vector<64x128xf32>
    %c320 = arith.constant 320 : index
    %c0_15 = arith.constant 0 : index
    %36 = vector.load %arg4[%c320, %c0_15] : memref<576x128xbf16, #tpu.memory_space<vmem>>, vector<64x128xbf16>
    %cst_16 = arith.constant dense<0.000000e+00> : vector<64x128xf32>
    %37 = tpu.matmul %13, %36, %cst_16 {dimension_numbers = #tpu.dot_dimension_numbers<[1], [0], [0], [1], [0, 0, 1, 1], [], []>} : vector<64x64xbf16>, vector<64x128xbf16>, vector<64x128xf32> -> vector<64x128xf32>
    %38 = arith.addf %35, %37 : vector<64x128xf32>
    %c384 = arith.constant 384 : index
    %c0_17 = arith.constant 0 : index
    %39 = vector.load %arg4[%c384, %c0_17] : memref<576x128xbf16, #tpu.memory_space<vmem>>, vector<64x128xbf16>
    %cst_18 = arith.constant dense<0.000000e+00> : vector<64x128xf32>
    %40 = tpu.matmul %15, %39, %cst_18 {dimension_numbers = #tpu.dot_dimension_numbers<[1], [0], [0], [1], [0, 0, 1, 1], [], []>} : vector<64x64xbf16>, vector<64x128xbf16>, vector<64x128xf32> -> vector<64x128xf32>
    %41 = arith.addf %38, %40 : vector<64x128xf32>
    %c448 = arith.constant 448 : index
    %c0_19 = arith.constant 0 : index
    %42 = vector.load %arg4[%c448, %c0_19] : memref<576x128xbf16, #tpu.memory_space<vmem>>, vector<64x128xbf16>
    %cst_20 = arith.constant dense<0.000000e+00> : vector<64x128xf32>
    %43 = tpu.matmul %17, %42, %cst_20 {dimension_numbers = #tpu.dot_dimension_numbers<[1], [0], [0], [1], [0, 0, 1, 1], [], []>} : vector<64x64xbf16>, vector<64x128xbf16>, vector<64x128xf32> -> vector<64x128xf32>
    %44 = arith.addf %41, %43 : vector<64x128xf32>
    %c512 = arith.constant 512 : index
    %c0_21 = arith.constant 0 : index
    %45 = vector.load %arg4[%c512, %c0_21] : memref<576x128xbf16, #tpu.memory_space<vmem>>, vector<64x128xbf16>
    %cst_22 = arith.constant dense<0.000000e+00> : vector<64x128xf32>
    %46 = tpu.matmul %19, %45, %cst_22 {dimension_numbers = #tpu.dot_dimension_numbers<[1], [0], [0], [1], [0, 0, 1, 1], [], []>} : vector<64x64xbf16>, vector<64x128xbf16>, vector<64x128xf32> -> vector<64x128xf32>
    %47 = arith.addf %44, %46 : vector<64x128xf32>
    %c0_23 = arith.constant 0 : index
    %c0_24 = arith.constant 0 : index
    %48 = vector.load %arg5[%c0_23, %c0_24] : memref<1x128xf32, #tpu.memory_space<vmem>>, vector<1x128xf32>
    %49 = vector.broadcast %48 : vector<1x128xf32> to vector<64x128xf32>
    %50 = arith.addf %47, %49 : vector<64x128xf32>
    %cst_25 = arith.constant 0.000000e+00 : f32
    %51 = vector.broadcast %cst_25 : f32 to vector<64x128xf32>
    %52 = arith.maximumf %50, %51 : vector<64x128xf32>
    %53 = arith.truncf %52 : vector<64x128xf32> to vector<64x128xbf16>
    %c0_26 = arith.constant 0 : index
    %c0_27 = arith.constant 0 : index
    %c0_28 = arith.constant 0 : index
    %54 = vector.load %arg6[%c0_26, %c0_27, %c0_28] : memref<1x64x128xbf16, #tpu.memory_space<vmem>>, vector<1x64x128xbf16>
    %55 = vector.shape_cast %54 : vector<1x64x128xbf16> to vector<64x128xbf16>
    %56 = vector.shape_cast %53 : vector<64x128xbf16> to vector<1x64x128xbf16>
    tpu.vector_store %arg6[%c0_26, %c0_27, %c0_28], %56 {strides = array<i32>} : memref<1x64x128xbf16, #tpu.memory_space<vmem>>, vector<1x64x128xbf16>,
    return
  }
  func.func @transform_0(%arg0: i32, %arg1: i32, %arg2: i32) -> (i32, i32, i32, i32, i32) {
    %c0_i32 = arith.constant 0 : i32
    %c0_i32_0 = arith.constant 0 : i32
    %c0_i32_1 = arith.constant 0 : i32
    %c0_i32_2 = arith.constant 0 : i32
    return %arg0, %arg1, %c0_i32, %c0_i32_0, %c0_i32_1 : i32, i32, i32, i32, i32
  }
  func.func @transform_1(%arg0: i32, %arg1: i32, %arg2: i32) -> (i32, i32) {
    %c0_i32 = arith.constant 0 : i32
    %c0_i32_0 = arith.constant 0 : i32
    return %c0_i32, %arg2 : i32, i32
  }
  func.func @transform_2(%arg0: i32, %arg1: i32, %arg2: i32) -> (i32, i32) {
    %c0_i32 = arith.constant 0 : i32
    %c0_i32_0 = arith.constant 0 : i32
    return %c0_i32, %arg2 : i32, i32
  }
  func.func @transform_3(%arg0: i32, %arg1: i32, %arg2: i32) -> (i32, i32, i32) {
    %c0_i32 = arith.constant 0 : i32
    return %arg0, %arg1, %arg2 : i32, i32, i32
  }
}

module attributes {stable_mosaic.version = 11 : i64} {
  func.func @_conv3x3_bn_act_kernel(%arg0: i32, %arg1: i32, %arg2: i32, %arg3: memref<1x1x10x10x128xbf16, #tpu.memory_space<vmem>>, %arg4: memref<1152x128xbf16, #tpu.memory_space<vmem>>, %arg5: memref<1x128xf32, #tpu.memory_space<vmem>>, %arg6: memref<1x64x128xf32, #tpu.memory_space<vmem>>) attributes {dimension_semantics = [#tpu.dimension_semantics<parallel>, #tpu.dimension_semantics<parallel>, #tpu.dimension_semantics<parallel>], iteration_bounds = array<i64: 2, 1, 1>, scalar_prefetch = 0 : i64, scratch_operands = 0 : i64, tpu.core_type = #tpu.core_type<tc>, window_params = [{transform_indices = @transform_0, window_bounds = array<i64: 1, 1, 10, 10, 128>}, {transform_indices = @transform_1, window_bounds = array<i64: 1152, 128>}, {transform_indices = @transform_2, window_bounds = array<i64: 1, 128>}, {transform_indices = @transform_3, window_bounds = array<i64: 1, 64, 128>}]} {
    %c0 = arith.constant 0 : index
    %c0_0 = arith.constant 0 : index
    %c0_1 = arith.constant 0 : index
    %c0_2 = arith.constant 0 : index
    %c0_3 = arith.constant 0 : index
    %0 = vector.load %arg3[%c0, %c0_0, %c0_1, %c0_2, %c0_3] : memref<1x1x10x10x128xbf16, #tpu.memory_space<vmem>>, vector<1x1x10x10x128xbf16>
    %1 = vector.shape_cast %0 : vector<1x1x10x10x128xbf16> to vector<10x10x128xbf16>
    %2 = vector.extract_strided_slice %1 {offsets = [0, 0, 0], sizes = [8, 8, 128], strides = [1, 1, 1]} : vector<10x10x128xbf16> to vector<8x8x128xbf16>
    %3 = vector.shape_cast %2 : vector<8x8x128xbf16> to vector<64x128xbf16>
    %4 = vector.extract_strided_slice %1 {offsets = [0, 1, 0], sizes = [8, 8, 128], strides = [1, 1, 1]} : vector<10x10x128xbf16> to vector<8x8x128xbf16>
    %5 = vector.shape_cast %4 : vector<8x8x128xbf16> to vector<64x128xbf16>
    %6 = vector.extract_strided_slice %1 {offsets = [0, 2, 0], sizes = [8, 8, 128], strides = [1, 1, 1]} : vector<10x10x128xbf16> to vector<8x8x128xbf16>
    %7 = vector.shape_cast %6 : vector<8x8x128xbf16> to vector<64x128xbf16>
    %8 = vector.extract_strided_slice %1 {offsets = [1, 0, 0], sizes = [8, 8, 128], strides = [1, 1, 1]} : vector<10x10x128xbf16> to vector<8x8x128xbf16>
    %9 = vector.shape_cast %8 : vector<8x8x128xbf16> to vector<64x128xbf16>
    %10 = vector.extract_strided_slice %1 {offsets = [1, 1, 0], sizes = [8, 8, 128], strides = [1, 1, 1]} : vector<10x10x128xbf16> to vector<8x8x128xbf16>
    %11 = vector.shape_cast %10 : vector<8x8x128xbf16> to vector<64x128xbf16>
    %12 = vector.extract_strided_slice %1 {offsets = [1, 2, 0], sizes = [8, 8, 128], strides = [1, 1, 1]} : vector<10x10x128xbf16> to vector<8x8x128xbf16>
    %13 = vector.shape_cast %12 : vector<8x8x128xbf16> to vector<64x128xbf16>
    %14 = vector.extract_strided_slice %1 {offsets = [2, 0, 0], sizes = [8, 8, 128], strides = [1, 1, 1]} : vector<10x10x128xbf16> to vector<8x8x128xbf16>
    %15 = vector.shape_cast %14 : vector<8x8x128xbf16> to vector<64x128xbf16>
    %16 = vector.extract_strided_slice %1 {offsets = [2, 1, 0], sizes = [8, 8, 128], strides = [1, 1, 1]} : vector<10x10x128xbf16> to vector<8x8x128xbf16>
    %17 = vector.shape_cast %16 : vector<8x8x128xbf16> to vector<64x128xbf16>
    %18 = vector.extract_strided_slice %1 {offsets = [2, 2, 0], sizes = [8, 8, 128], strides = [1, 1, 1]} : vector<10x10x128xbf16> to vector<8x8x128xbf16>
    %19 = vector.shape_cast %18 : vector<8x8x128xbf16> to vector<64x128xbf16>
    %20 = tpu.concatenate %3, %5, %7, %9, %11, %13, %15, %17, %19 in 1 : vector<64x128xbf16>, vector<64x128xbf16>, vector<64x128xbf16>, vector<64x128xbf16>, vector<64x128xbf16>, vector<64x128xbf16>, vector<64x128xbf16>, vector<64x128xbf16>, vector<64x128xbf16> -> vector<64x1152xbf16>
    %c0_4 = arith.constant 0 : index
    %c0_5 = arith.constant 0 : index
    %21 = vector.load %arg4[%c0_4, %c0_5] : memref<1152x128xbf16, #tpu.memory_space<vmem>>, vector<1152x128xbf16>
    %cst = arith.constant dense<0.000000e+00> : vector<64x128xf32>
    %22 = tpu.matmul %20, %21, %cst {dimension_numbers = #tpu.dot_dimension_numbers<[1], [0], [0], [1], [0, 0, 1, 1], [], []>} : vector<64x1152xbf16>, vector<1152x128xbf16>, vector<64x128xf32> -> vector<64x128xf32>
    %c0_6 = arith.constant 0 : index
    %c0_7 = arith.constant 0 : index
    %23 = vector.load %arg5[%c0_6, %c0_7] : memref<1x128xf32, #tpu.memory_space<vmem>>, vector<1x128xf32>
    %24 = vector.broadcast %23 : vector<1x128xf32> to vector<64x128xf32>
    %25 = arith.addf %22, %24 : vector<64x128xf32>
    %cst_8 = arith.constant 0.000000e+00 : f32
    %26 = vector.broadcast %cst_8 : f32 to vector<64x128xf32>
    %27 = arith.maximumf %25, %26 : vector<64x128xf32>
    %c0_9 = arith.constant 0 : index
    %c0_10 = arith.constant 0 : index
    %c0_11 = arith.constant 0 : index
    %28 = vector.load %arg6[%c0_9, %c0_10, %c0_11] : memref<1x64x128xf32, #tpu.memory_space<vmem>>, vector<1x64x128xf32>
    %29 = vector.shape_cast %28 : vector<1x64x128xf32> to vector<64x128xf32>
    %30 = vector.shape_cast %27 : vector<64x128xf32> to vector<1x64x128xf32>
    tpu.vector_store %arg6[%c0_9, %c0_10, %c0_11], %30 {strides = array<i32>} : memref<1x64x128xf32, #tpu.memory_space<vmem>>, vector<1x64x128xf32>,
    return
  }
  func.func @transform_0(%arg0: i32, %arg1: i32, %arg2: i32) -> (i32, i32, i32, i32, i32) {
    %c0_i32 = arith.constant 0 : i32
    %c0_i32_0 = arith.constant 0 : i32
    %c0_i32_1 = arith.constant 0 : i32
    %c0_i32_2 = arith.constant 0 : i32
    return %arg0, %arg1, %c0_i32, %c0_i32_0, %c0_i32_1 : i32, i32, i32, i32, i32
  }
  func.func @transform_1(%arg0: i32, %arg1: i32, %arg2: i32) -> (i32, i32) {
    %c0_i32 = arith.constant 0 : i32
    %c0_i32_0 = arith.constant 0 : i32
    return %c0_i32, %arg2 : i32, i32
  }
  func.func @transform_2(%arg0: i32, %arg1: i32, %arg2: i32) -> (i32, i32) {
    %c0_i32 = arith.constant 0 : i32
    %c0_i32_0 = arith.constant 0 : i32
    return %c0_i32, %arg2 : i32, i32
  }
  func.func @transform_3(%arg0: i32, %arg1: i32, %arg2: i32) -> (i32, i32, i32) {
    %c0_i32 = arith.constant 0 : i32
    return %arg0, %arg1, %arg2 : i32, i32, i32
  }
}

</mosaic_0001>

<llo_original>
// kernel: down_forward.2
$region0: #{down_forward.2}
  #allocation0 [shape = 'u32[]', space=smem, size = 0x4, offset = 0x4, fixed_abs, tag = 'smem constant byte address 0x4 - core index']
  #allocation1 [shape = 'u32[72,128]{1,0:T(1,128)}', space=vmem, size = 0x9000, scoped, tag = 'internal scratch']
  %s0 = inlined_call_operand.vmem [shape: bf16[2,1,10,10,64], index: 0, kind: input, shape index: {}]
  %s1 = inlined_call_operand.vmem [shape: bf16[576,128], index: 1, kind: input, shape index: {}]
  %s2 = inlined_call_operand.vmem [shape: f32[1,128], index: 2, kind: input, shape index: {}]
  %s3 = inlined_call_operand.vmem [shape: bf16[2,64,128], index: 3, kind: output, shape index: {}]
  %s4 = sld [smem:[#allocation0]]
  $region45: #{down_forward.2} parent=0
    _
  %s6 = ssub.s32 1, %s4
  %s7 = scalar_select 0, %s6, %s4
  loop: start=0, step=1, limit=4
  $region2: #{down_forward.2} parent=0 // loop_pre_header
    _
  $region3: #{down_forward.2} parent=0 // loop_header
    %s9 = sphi 0, %s13
    %p10 = scmp.ge.s32.totalorder %s9, 4
    %s16 = sphi 0, %s35
    %s17 = sphi 0, %s31
    %s18 = sphi 0, %s27
    %s19 = sphi 0, %s16
    %s20 = sphi 0, %s17
    %s21 = sphi 0, %s18
    %s22 = sphi 0, %s19
    %s23 = sphi 0, %s20
    %s24 = sphi 0, %s21
    %s40 = sphi 0, %s42
    %s43 = sphi 0, %s40
    %s44 = sphi 0, %s43
    %s60 = sphi 0, %s44
    %s66 = sphi 0, %s68
    %s69 = sphi 0, %s66
    %s70 = sphi 0, %s69
    %s86 = sphi 0, %s70
    %s92 = sphi 0, %s94
    %s95 = sphi 0, %s92
    %s96 = sphi 0, %s95
    %s112 = sphi 0, %s96
    %s122 = sphi 0, %s124
    %s125 = sphi 0, %s122
    %s126 = sphi 0, %s125
    %s142 = sphi 0, %s126
  $region4: #{down_forward.2} parent=0 // loop_header_branch
    %12 = sbr.rel (%p10) target = $region8
  $region5: #{down_forward.2} parent=0 // loop_body
    %s14 = ssub.s32 %s9, 1
    %s15 = ssub.s32 %s9, 2
    %s25 = sadd.s32 1, %s18
    %p26 = scmp.ge.s32.totalorder %s25, 1
    %s27 = scalar_select %p26, 0, %s25
    %s28 = sadd.s32 1, %s17
    %s29 = scalar_select %p26, %s28, %s17
    %p30 = scmp.ge.s32.totalorder %s29, 1
    %s31 = scalar_select %p30, 0, %s29
    %s32 = sadd.s32 1, %s16
    %s33 = scalar_select %p30, %s32, %s16
    %p34 = scmp.ge.s32.totalorder %s33, 2
    %s35 = scalar_select %p34, 0, %s33
    %s36 = ssub.s32 %s16, %s35
    %s37 = ssub.s32 %s17, %s31
    %s38 = sor.u32 %s36, %s37
    %p39 = scmp.eq.s32.totalorder %s38, 0
    %s41 = sadd.s32 %s40, 1
    %s42 = scalar_select %p39, %s40, %s41
    %p45 = pneg %p39
    %p46 = scmp.eq.s32.totalorder %s9, 1
    %p47 = por %p45, %p46
    %p48 = scmp.ne.s32.totalorder %s40, %s43
    %p49 = scmp.eq.s32.totalorder %s9, 0
    %p50 = por %p48, %p49
    %p51 = scmp.ne.s32.totalorder %s40, %s43
    %p52 = scmp.eq.s32.totalorder %s14, 1
    %p53 = por %p51, %p52
    %p54 = scmp.ne.s32.totalorder %s43, %s44
    %p55 = scmp.eq.s32.totalorder %s14, 0
    %p56 = por %p54, %p55
    %p57 = scmp.ne.s32.totalorder %s43, %s44
    %p58 = scmp.eq.s32.totalorder %s15, 1
    %p59 = por %p57, %p58
    %p61 = scmp.ne.s32.totalorder %s44, %s60
    %p62 = scmp.eq.s32.totalorder %s15, 0
    %p63 = por %p61, %p62
    %s64 = ssub.s32 %s18, %s27
    %p65 = scmp.eq.s32.totalorder %s64, 0
    %s67 = sadd.s32 %s66, 1
    %s68 = scalar_select %p65, %s66, %s67
    %p71 = pneg %p65
    %p72 = scmp.eq.s32.totalorder %s9, 1
    %p73 = por %p71, %p72
    %p74 = scmp.ne.s32.totalorder %s66, %s69
    %p75 = scmp.eq.s32.totalorder %s9, 0
    %p76 = por %p74, %p75
    %p77 = scmp.ne.s32.totalorder %s66, %s69
    %p78 = scmp.eq.s32.totalorder %s14, 1
    %p79 = por %p77, %p78
    %p80 = scmp.ne.s32.totalorder %s69, %s70
    %p81 = scmp.eq.s32.totalorder %s14, 0
    %p82 = por %p80, %p81
    %p83 = scmp.ne.s32.totalorder %s69, %s70
    %p84 = scmp.eq.s32.totalorder %s15, 1
    %p85 = por %p83, %p84
    %p87 = scmp.ne.s32.totalorder %s70, %s86
    %p88 = scmp.eq.s32.totalorder %s15, 0
    %p89 = por %p87, %p88
    %s90 = ssub.s32 %s18, %s27
    %p91 = scmp.eq.s32.totalorder %s90, 0
    %s93 = sadd.s32 %s92, 1
    %s94 = scalar_select %p91, %s92, %s93
    %p97 = pneg %p91
    %p98 = scmp.eq.s32.totalorder %s9, 1
    %p99 = por %p97, %p98
    %p100 = scmp.ne.s32.totalorder %s92, %s95
    %p101 = scmp.eq.s32.totalorder %s9, 0
    %p102 = por %p100, %p101
    %p103 = scmp.ne.s32.totalorder %s92, %s95
    %p104 = scmp.eq.s32.totalorder %s14, 1
    %p105 = por %p103, %p104
    %p106 = scmp.ne.s32.totalorder %s95, %s96
    %p107 = scmp.eq.s32.totalorder %s14, 0
    %p108 = por %p106, %p107
    %p109 = scmp.ne.s32.totalorder %s95, %s96
    %p110 = scmp.eq.s32.totalorder %s15, 1
    %p111 = por %p109, %p110
    %p113 = scmp.ne.s32.totalorder %s96, %s112
    %p114 = scmp.eq.s32.totalorder %s15, 0
    %p115 = por %p113, %p114
    %s116 = ssub.s32 %s16, %s35
    %s117 = ssub.s32 %s17, %s31
    %s118 = sor.u32 %s116, %s117
    %s119 = ssub.s32 %s18, %s27
    %s120 = sor.u32 %s118, %s119
    %p121 = scmp.eq.s32.totalorder %s120, 0
    %s123 = sadd.s32 %s122, 1
    %s124 = scalar_select %p121, %s122, %s123
    %p127 = pneg %p121
    %p128 = scmp.eq.s32.totalorder %s9, 1
    %p129 = por %p127, %p128
    %p130 = scmp.ne.s32.totalorder %s122, %s125
    %p131 = scmp.eq.s32.totalorder %s9, 0
    %p132 = por %p130, %p131
    %p133 = scmp.ne.s32.totalorder %s122, %s125
    %p134 = scmp.eq.s32.totalorder %s14, 1
    %p135 = por %p133, %p134
    %p136 = scmp.ne.s32.totalorder %s125, %s126
    %p137 = scmp.eq.s32.totalorder %s14, 0
    %p138 = por %p136, %p137
    %p139 = scmp.ne.s32.totalorder %s125, %s126
    %p140 = scmp.eq.s32.totalorder %s15, 1
    %p141 = por %p139, %p140
    %p143 = scmp.ne.s32.totalorder %s126, %s142
    %p144 = scmp.eq.s32.totalorder %s15, 0
    %p145 = por %p143, %p144
    %p146 = scmp.le.s32.totalorder 1, %s9
    %p147 = scmp.lt.s32.totalorder %s9, 3
    %p148 = pnand %p146, %p147
    %p149 = pneg %p148
    // Predicated region
    $region9: #{down_forward.2} parent=5 // pred_check
      _
    $region10: #{down_forward.2} parent=5 // pred_check_branch
      %151 = sbr.rel (%p148) target = $region12
    $region11: #{down_forward.2} parent=5 // pred_region
      %s152 = ssub.s32 %s9, 1
      // Predicated region
      $region13: #{down_forward.2} parent=11 // pred_check
        %p153 = pneg %p82
      $region14: #{down_forward.2} parent=11 // pred_check_branch
        %155 = sbr.rel (%p153) target = $region16
      $region15: #{down_forward.2} parent=11 // pred_region
        %p156 = scmp.lt.s32.totalorder %s21, 0
        %s157 = scalar_select %p156, %s21, 0
        %s158 = smul.addr %s157, 4
        %s159 = scalar_lea.vmem %s1, %s158
      $region16: #{down_forward.2} parent=11 // pred_fallthru
        _
      // Predicated region
      $region17: #{down_forward.2} parent=11 // pred_check
        %p160 = pneg %p108
      $region18: #{down_forward.2} parent=11 // pred_check_branch
        %162 = sbr.rel (%p160) target = $region20
      $region19: #{down_forward.2} parent=11 // pred_region
        %p163 = scmp.lt.s32.totalorder %s21, 0
        %s164 = scalar_select %p163, %s21, 0
        %s165 = scalar_lea.vmem %s2, %s164
      $region20: #{down_forward.2} parent=11 // pred_fallthru
        _
    $region12: #{down_forward.2} parent=5 // pred_fallthru
      _
    %p166 = scmp.lt.s32.totalorder %s9, 2
    // Predicated region
    $region21: #{down_forward.2} parent=5 // pred_check
      %p167 = pneg %p166
    $region22: #{down_forward.2} parent=5 // pred_check_branch
      %169 = sbr.rel (%p167) target = $region24
    $region23: #{down_forward.2} parent=5 // pred_region
      // Predicated region
      $region25: #{down_forward.2} parent=23 // pred_check
        %p170 = pneg %p50
      $region26: #{down_forward.2} parent=23 // pred_check_branch
        %172 = sbr.rel (%p170) target = $region28
      $region27: #{down_forward.2} parent=23 // pred_region
        %p173 = scmp.lt.s32.totalorder %s16, 1
        %s174 = scalar_select %p173, %s16, 1
        %p175 = scmp.lt.s32.totalorder %s17, 0
        %s176 = scalar_select %p175, %s17, 0
        %s177 = smul.addr %s176, 20
        %s178 = smul.addr %s174, 20
        %s179 = sadd.s32 %s177, %s178
        %s180 = smul.addr %s179, 4
        %s181 = scalar_lea.vmem %s0, %s180
      $region28: #{down_forward.2} parent=23 // pred_fallthru
        _
    $region24: #{down_forward.2} parent=5 // pred_fallthru
      _
    %p182 = scmp.le.s32.totalorder 1, %s9
    %p183 = scmp.lt.s32.totalorder %s9, 3
    %p184 = pnand %p182, %p183
    %p185 = pneg %p184
    // Predicated region
    $region29: #{down_forward.2} parent=5 // pred_check
      _
    $region30: #{down_forward.2} parent=5 // pred_check_branch
      %187 = sbr.rel (%p184) target = $region32
    $region31: #{down_forward.2} parent=5 // pred_region
      %s188 = ssub.s32 %s9, 1
      %p189 = scmp.lt.s32.totalorder %s19, 1
      %s190 = scalar_select %p189, %s19, 1
      %p191 = scmp.lt.s32.totalorder %s20, 0
      %s192 = scalar_select %p191, %s20, 0
      %s193 = smul.addr %s192, 20
      %s194 = smul.addr %s190, 20
      %s195 = sadd.s32 %s193, %s194
      %s196 = smul.addr %s195, 4
      %s197 = scalar_lea.vmem %s0, %s196
      %p198 = pneg %p56
      %p199 = pneg %p53
      %p200 = scmp.lt.s32.totalorder %s21, 0
      %s201 = scalar_select %p200, %s21, 0
      %s202 = smul.addr %s201, 4
      %s203 = scalar_lea.vmem %s1, %s202
      %p204 = pneg %p82
      %p205 = pneg %p79
      %p206 = scmp.lt.s32.totalorder %s21, 0
      %s207 = scalar_select %p206, %s21, 0
      %s208 = scalar_lea.vmem %s2, %s207
      %p209 = pneg %p108
      %p210 = pneg %p105
      %p211 = pneg %p138
      %p212 = pneg %p135
      %s213 = smul.u32 8, %s20
      %p214 = scmp.lt.s32.totalorder %s19, 1
      %s215 = scalar_select %p214, %s19, 1
      %p216 = scmp.lt.s32.totalorder %s213, 7
      %s217 = scalar_select %p216, %s213, 7
      %p218 = scmp.lt.s32.totalorder %s21, 0
      %s219 = scalar_select %p218, %s21, 0
      %s220 = sadd.s32 %s219, %s217
      %s221 = smul.addr %s215, 8
      %s222 = sadd.s32 %s220, %s221
      %s223 = smul.addr %s222, 4
      %s224 = scalar_lea.vmem %s3, %s223
      %p225 = scmp.lt.s32.totalorder %s19, 1
      %s226 = scalar_select %p225, %s19, 1
      %p227 = scmp.lt.s32.totalorder %s20, 0
      %s228 = scalar_select %p227, %s20, 0
      %s229 = smul.addr %s228, 20
      %s230 = smul.addr %s226, 20
      %s231 = sadd.s32 %s229, %s230
      %s232 = smul.addr %s231, 4
      %s233 = scalar_lea.vmem %s0, %s232
      %p234 = scmp.lt.s32.totalorder %s21, 0
      %s235 = scalar_select %p234, %s21, 0
      %s236 = smul.addr %s235, 4
      %s237 = scalar_lea.vmem %s1, %s236
      %p238 = scmp.lt.s32.totalorder %s21, 0
      %s239 = scalar_select %p238, %s21, 0
      %s240 = scalar_lea.vmem %s2, %s239
      %s241 = smul.u32 8, %s20
      %p242 = scmp.lt.s32.totalorder %s19, 1
      %s243 = scalar_select %p242, %s19, 1
      %p244 = scmp.lt.s32.totalorder %s241, 7
      %s245 = scalar_select %p244, %s241, 7
      %p246 = scmp.lt.s32.totalorder %s21, 0
      %s247 = scalar_select %p246, %s21, 0
      %s248 = sadd.s32 %s247, %s245
      %s249 = smul.addr %s243, 8
      %s250 = sadd.s32 %s248, %s249
      %s251 = smul.addr %s250, 4
      %s252 = scalar_lea.vmem %s3, %s251
      %s253 = smul.u32 8, %s20
      %v255 = vld [vmem:[%s233] sm:$0xf]
      %v256 = vld [vmem:[%s233 + $0x4] sm:$0x1]
      %v257 = vld [vmem:[%s233 + $0x8] sm:$0xf]
      %v258 = vld [vmem:[%s233 + $0xc] sm:$0x1]
      %v259 = vld [vmem:[%s233 + $0x10] sm:$0xf]
      %v260 = vld [vmem:[%s233 + $0x14] sm:$0x1]
      %v261 = vld [vmem:[%s233 + $0x18] sm:$0xf]
      %v262 = vld [vmem:[%s233 + $0x1c] sm:$0x1]
      %v263 = vld [vmem:[%s233 + $0x20] sm:$0xf]
      %v264 = vld [vmem:[%s233 + $0x24] sm:$0x1]
      %v265 = vld [vmem:[%s233 + $0x28] sm:$0xf]
      %v266 = vld [vmem:[%s233 + $0x2c] sm:$0x1]
      %v267 = vld [vmem:[%s233 + $0x30] sm:$0xf]
      %v268 = vld [vmem:[%s233 + $0x34] sm:$0x1]
      %v269 = vld [vmem:[%s233 + $0x38] sm:$0xf]
      %v270 = vld [vmem:[%s233 + $0x3c] sm:$0x1]
      %v271 = vld [vmem:[%s233 + $0x40] sm:$0xf]
      %v272 = vld [vmem:[%s233 + $0x44] sm:$0x1]
      %v273 = vld [vmem:[%s233 + $0x48] sm:$0xf]
      %v274 = vld [vmem:[%s233 + $0x4c] sm:$0x1]
      %vm275 = vsmask.f32 3328
      %vm276 = vsmask.f32 7440
      %vm277 = vmor %vm275, %vm276
      %v279 = vshrl.u32 %v255, 16
      %v281 = vrot.slane %v279, 4
      %v282 = vshll.u32 %v255, 16
      %v284 = vrot.slane %v282, 5
      %v285 = vor.u32 %v281, %v284
      %v286 = vrot.slane %v285, 4
      %v288 = vshll.u32 %v256, 16
      %v290 = vrot.slane %v288, 5
      %v291 = vsel %vm277, %v286, %v290
      %v293 = vshrl.u32 %v257, 16
      %v295 = vrot.slane %v293, 4
      %v296 = vshll.u32 %v257, 16
      %v298 = vrot.slane %v296, 5
      %v299 = vor.u32 %v295, %v298
      %v300 = vrot.slane %v299, 4
      %v302 = vshll.u32 %v258, 16
      %v304 = vrot.slane %v302, 5
      %v305 = vsel %vm277, %v300, %v304
      %v307 = vshrl.u32 %v259, 16
      %v309 = vrot.slane %v307, 4
      %v310 = vshll.u32 %v259, 16
      %v312 = vrot.slane %v310, 5
      %v313 = vor.u32 %v309, %v312
      %v314 = vrot.slane %v313, 4
      %v316 = vshll.u32 %v260, 16
      %v318 = vrot.slane %v316, 5
      %v319 = vsel %vm277, %v314, %v318
      %v321 = vshrl.u32 %v261, 16
      %v323 = vrot.slane %v321, 4
      %v324 = vshll.u32 %v261, 16
      %v326 = vrot.slane %v324, 5
      %v327 = vor.u32 %v323, %v326
      %v328 = vrot.slane %v327, 4
      %v330 = vshll.u32 %v262, 16
      %v332 = vrot.slane %v330, 5
      %v333 = vsel %vm277, %v328, %v332
      %v335 = vshrl.u32 %v263, 16
      %v337 = vrot.slane %v335, 4
      %v338 = vshll.u32 %v263, 16
      %v340 = vrot.slane %v338, 5
      %v341 = vor.u32 %v337, %v340
      %v342 = vrot.slane %v341, 4
      %v344 = vshll.u32 %v264, 16
      %v346 = vrot.slane %v344, 5
      %v347 = vsel %vm277, %v342, %v346
      %v349 = vshrl.u32 %v265, 16
      %v351 = vrot.slane %v349, 4
      %v352 = vshll.u32 %v265, 16
      %v354 = vrot.slane %v352, 5
      %v355 = vor.u32 %v351, %v354
      %v356 = vrot.slane %v355, 4
      %v358 = vshll.u32 %v266, 16
      %v360 = vrot.slane %v358, 5
      %v361 = vsel %vm277, %v356, %v360
      %v363 = vshrl.u32 %v267, 16
      %v365 = vrot.slane %v363, 4
      %v366 = vshll.u32 %v267, 16
      %v368 = vrot.slane %v366, 5
      %v369 = vor.u32 %v365, %v368
      %v370 = vrot.slane %v369, 4
      %v372 = vshll.u32 %v268, 16
      %v374 = vrot.slane %v372, 5
      %v375 = vsel %vm277, %v370, %v374
      %v377 = vshrl.u32 %v269, 16
      %v379 = vrot.slane %v377, 4
      %v380 = vshll.u32 %v269, 16
      %v382 = vrot.slane %v380, 5
      %v383 = vor.u32 %v379, %v382
      %v384 = vrot.slane %v383, 4
      %v386 = vshll.u32 %v270, 16
      %v388 = vrot.slane %v386, 5
      %v389 = vsel %vm277, %v384, %v388
      %vm406 = vcmask 1042432
      %vm407 = vcmask 1046532
      %vm408 = vmor %vm406, %vm407
      %v409 = vrot.slane %v255, 5
      %v410 = vrot.slane %v409, 4
      %v411 = vrot.slane %v256, 5
      %v412 = vsel %vm408, %v410, %v411
      %v413 = vrot.slane %v257, 5
      %v414 = vrot.slane %v413, 4
      %v415 = vrot.slane %v258, 5
      %v416 = vsel %vm408, %v414, %v415
      %v417 = vrot.slane %v259, 5
      %v418 = vrot.slane %v417, 4
      %v419 = vrot.slane %v260, 5
      %v420 = vsel %vm408, %v418, %v419
      %v421 = vrot.slane %v261, 5
      %v422 = vrot.slane %v421, 4
      %v423 = vrot.slane %v262, 5
      %v424 = vsel %vm408, %v422, %v423
      %v425 = vrot.slane %v263, 5
      %v426 = vrot.slane %v425, 4
      %v427 = vrot.slane %v264, 5
      %v428 = vsel %vm408, %v426, %v427
      %v429 = vrot.slane %v265, 5
      %v430 = vrot.slane %v429, 4
      %v431 = vrot.slane %v266, 5
      %v432 = vsel %vm408, %v430, %v431
      %v433 = vrot.slane %v267, 5
      %v434 = vrot.slane %v433, 4
      %v435 = vrot.slane %v268, 5
      %v436 = vsel %vm408, %v434, %v435
      %v437 = vrot.slane %v269, 5
      %v438 = vrot.slane %v437, 4
      %v439 = vrot.slane %v270, 5
      %v440 = vsel %vm408, %v438, %v439
      %v442 = vshrl.u32 %v271, 16
      %v444 = vrot.slane %v442, 4
      %v445 = vshll.u32 %v271, 16
      %v447 = vrot.slane %v445, 5
      %v448 = vor.u32 %v444, %v447
      %v449 = vrot.slane %v448, 4
      %v451 = vshll.u32 %v272, 16
      %v453 = vrot.slane %v451, 5
      %v454 = vsel %vm277, %v449, %v453
      %v457 = vrot.slane %v271, 5
      %v458 = vrot.slane %v457, 4
      %v459 = vrot.slane %v272, 5
      %v460 = vsel %vm408, %v458, %v459
      %v462 = vshrl.u32 %v273, 16
      %v464 = vrot.slane %v462, 4
      %v465 = vshll.u32 %v273, 16
      %v467 = vrot.slane %v465, 5
      %v468 = vor.u32 %v464, %v467
      %v469 = vrot.slane %v468, 4
      %v471 = vshll.u32 %v274, 16
      %v473 = vrot.slane %v471, 5
      %v474 = vsel %vm277, %v469, %v473
      %v477 = vrot.slane %v273, 5
      %v478 = vrot.slane %v477, 4
      %v479 = vrot.slane %v274, 5
      %v480 = vsel %vm408, %v478, %v479
      %v481 = vld [vmem:[%s237] sm:$0xf]
      %v482 = vld [vmem:[%s237 + $0x4] sm:$0xf]
      %v483 = vld [vmem:[%s237 + $0x8] sm:$0xf]
      %v484 = vld [vmem:[%s237 + $0xc] sm:$0xf]
      %v485 = vld [vmem:[%s237 + $0x10] sm:$0xf]
      %v486 = vld [vmem:[%s237 + $0x14] sm:$0xf]
      %v487 = vld [vmem:[%s237 + $0x18] sm:$0xf]
      %v488 = vld [vmem:[%s237 + $0x1c] sm:$0xf]
      %v489 = vld [vmem:[%s237 + $0x20] sm:$0xf]
      %v490 = vld [vmem:[%s237 + $0x24] sm:$0xf]
      %v491 = vld [vmem:[%s237 + $0x28] sm:$0xf]
      %v492 = vld [vmem:[%s237 + $0x2c] sm:$0xf]
      %v493 = vld [vmem:[%s237 + $0x30] sm:$0xf]
      %v494 = vld [vmem:[%s237 + $0x34] sm:$0xf]
      %v495 = vld [vmem:[%s237 + $0x38] sm:$0xf]
      %v496 = vld [vmem:[%s237 + $0x3c] sm:$0xf]
      %v497 = vunpack.c.l.b16 %v291
      %v498 = vunpack.c.l.b16 %v305
      %v499 = vunpack.c.l.b16 %v319
      %v500 = vunpack.c.l.b16 %v333
      %v501 = vunpack.c.l.b16 %v347
      %v502 = vunpack.c.l.b16 %v361
      %v503 = vunpack.c.l.b16 %v375
      %v504 = vunpack.c.l.b16 %v389
      %v505 = vpack.c.b16 %v498, %v497
      %v506 = vpack.c.b16 %v500, %v499
      %v507 = vpack.c.b16 %v502, %v501
      %v508 = vpack.c.b16 %v504, %v503
      %v517 = vunpack.c.l.b16 %v489
      %v518 = vunpack.c.l.b16 %v490
      %v519 = vunpack.c.l.b16 %v491
      %v520 = vunpack.c.l.b16 %v492
      %v521 = vunpack.c.l.b16 %v493
      %v522 = vunpack.c.l.b16 %v494
      %v523 = vunpack.c.l.b16 %v495
      %v524 = vunpack.c.l.b16 %v496
      %v525 = vpack.c.b16 %v518, %v517
      %v526 = vpack.c.b16 %v520, %v519
      %v527 = vpack.c.b16 %v522, %v521
      %v528 = vpack.c.b16 %v524, %v523
      %vm533 = vcmask 523264
      %v535 = vsel %vm533, %v505, 0
      %v538 = vsel %vm533, %v506, 0
      %v541 = vsel %vm533, %v507, 0
      %v544 = vsel %vm533, %v508, 0
      %546 = vmatpush.bf16.msra.mxu0 0
      %547 = vmatpush.bf16.msra.mxu0 0
      %548 = vmatpush.bf16.msra.mxu0 0
      %549 = vmatpush.bf16.msra.mxu0 0
      %550 = vmatpush.bf16.msra.mxu0 %v528
      %551 = vmatpush.bf16.msra.mxu0 %v527
      %552 = vmatpush.bf16.msra.mxu0 %v526
      %553 = vmatpush.bf16.msra.mxu0 %v525
      %554 = vmatmul.bf16.gmra.mxu0 %v535
      %v555 = vpop.f32.mrf.mxu0
      %v556 = vadd.f32 0.0, %v555
      %v557 = vpop.f32.mrf.mxu0
      %v558 = vadd.f32 0.0, %v557
      %559 = vmatmul.bf16.gmra.mxu0 %v538
      %v560 = vpop.f32.mrf.mxu0
      %v561 = vadd.f32 0.0, %v560
      %v562 = vpop.f32.mrf.mxu0
      %v563 = vadd.f32 0.0, %v562
      %564 = vmatmul.bf16.gmra.mxu0 %v541
      %v565 = vpop.f32.mrf.mxu0
      %v566 = vadd.f32 0.0, %v565
      %v567 = vpop.f32.mrf.mxu0
      %v568 = vadd.f32 0.0, %v567
      %569 = vmatmul.bf16.gmra.mxu0 %v544
      %v570 = vpop.f32.mrf.mxu0
      %v571 = vadd.f32 0.0, %v570
      %v572 = vpop.f32.mrf.mxu0
      %v573 = vadd.f32 0.0, %v572
      %574 = vdwg.mxu0
      %v575 = vunpack.c.l.b16 %v255
      %v576 = vunpack.c.l.b16 %v257
      %v577 = vunpack.c.l.b16 %v259
      %v578 = vunpack.c.l.b16 %v261
      %v579 = vunpack.c.l.b16 %v263
      %v580 = vunpack.c.l.b16 %v265
      %v581 = vunpack.c.l.b16 %v267
      %v582 = vunpack.c.l.b16 %v269
      %v583 = vpack.c.b16 %v576, %v575
      %v584 = vpack.c.b16 %v578, %v577
      %v585 = vpack.c.b16 %v580, %v579
      %v586 = vpack.c.b16 %v582, %v581
      %v595 = vunpack.c.l.b16 %v481
      %v596 = vunpack.c.l.b16 %v482
      %v597 = vunpack.c.l.b16 %v483
      %v598 = vunpack.c.l.b16 %v484
      %v599 = vunpack.c.l.b16 %v485
      %v600 = vunpack.c.l.b16 %v486
      %v601 = vunpack.c.l.b16 %v487
      %v602 = vunpack.c.l.b16 %v488
      %v603 = vpack.c.b16 %v596, %v595
      %v604 = vpack.c.b16 %v598, %v597
      %v605 = vpack.c.b16 %v600, %v599
      %v606 = vpack.c.b16 %v602, %v601
      %v612 = vsel %vm533, %v583, 0
      %v615 = vsel %vm533, %v584, 0
      %v618 = vsel %vm533, %v585, 0
      %v621 = vsel %vm533, %v586, 0
      %623 = vmatpush.bf16.msra.mxu0 0
      %624 = vmatpush.bf16.msra.mxu0 0
      %625 = vmatpush.bf16.msra.mxu0 0
      %626 = vmatpush.bf16.msra.mxu0 0
      %627 = vmatpush.bf16.msra.mxu0 %v606
      %628 = vmatpush.bf16.msra.mxu0 %v605
      %629 = vmatpush.bf16.msra.mxu0 %v604
      %630 = vmatpush.bf16.msra.mxu0 %v603
      %631 = vmatmul.bf16.gmra.mxu0 %v612
      %v632 = vpop.f32.mrf.mxu0
      %v633 = vadd.f32 %v556, %v632
      %v634 = vpop.f32.mrf.mxu0
      %v635 = vadd.f32 %v558, %v634
      %636 = vmatmul.bf16.gmra.mxu0 %v615
      %v637 = vpop.f32.mrf.mxu0
      %v638 = vadd.f32 %v561, %v637
      %v639 = vpop.f32.mrf.mxu0
      %v640 = vadd.f32 %v563, %v639
      %641 = vmatmul.bf16.gmra.mxu0 %v618
      %v642 = vpop.f32.mrf.mxu0
      %v643 = vadd.f32 %v566, %v642
      %v644 = vpop.f32.mrf.mxu0
      %v645 = vadd.f32 %v568, %v644
      %646 = vmatmul.bf16.gmra.mxu0 %v621
      %v647 = vpop.f32.mrf.mxu0
      %v648 = vadd.f32 %v571, %v647
      %v649 = vpop.f32.mrf.mxu0
      %v650 = vadd.f32 %v573, %v649
      %651 = vdwg.mxu0
      %v652 = vld [vmem:[%s237 + $0x40] sm:$0xf]
      %v653 = vld [vmem:[%s237 + $0x44] sm:$0xf]
      %v654 = vld [vmem:[%s237 + $0x48] sm:$0xf]
      %v655 = vld [vmem:[%s237 + $0x4c] sm:$0xf]
      %v656 = vld [vmem:[%s237 + $0x50] sm:$0xf]
      %v657 = vld [vmem:[%s237 + $0x54] sm:$0xf]
      %v658 = vld [vmem:[%s237 + $0x58] sm:$0xf]
      %v659 = vld [vmem:[%s237 + $0x5c] sm:$0xf]
      %v660 = vunpack.c.l.b16 %v412
      %v661 = vunpack.c.l.b16 %v416
      %v662 = vunpack.c.l.b16 %v420
      %v663 = vunpack.c.l.b16 %v424
      %v664 = vunpack.c.l.b16 %v428
      %v665 = vunpack.c.l.b16 %v432
      %v666 = vunpack.c.l.b16 %v436
      %v667 = vunpack.c.l.b16 %v440
      %v668 = vpack.c.b16 %v661, %v660
      %v669 = vpack.c.b16 %v663, %v662
      %v670 = vpack.c.b16 %v665, %v664
      %v671 = vpack.c.b16 %v667, %v666
      %v680 = vunpack.c.l.b16 %v652
      %v681 = vunpack.c.l.b16 %v653
      %v682 = vunpack.c.l.b16 %v654
      %v683 = vunpack.c.l.b16 %v655
      %v684 = vunpack.c.l.b16 %v656
      %v685 = vunpack.c.l.b16 %v657
      %v686 = vunpack.c.l.b16 %v658
      %v687 = vunpack.c.l.b16 %v659
      %v688 = vpack.c.b16 %v681, %v680
      %v689 = vpack.c.b16 %v683, %v682
      %v690 = vpack.c.b16 %v685, %v684
      %v691 = vpack.c.b16 %v687, %v686
      %v697 = vsel %vm533, %v668, 0
      %v700 = vsel %vm533, %v669, 0
      %v703 = vsel %vm533, %v670, 0
      %v706 = vsel %vm533, %v671, 0
      %708 = vmatpush.bf16.msra.mxu0 0
      %709 = vmatpush.bf16.msra.mxu0 0
      %710 = vmatpush.bf16.msra.mxu0 0
      %711 = vmatpush.bf16.msra.mxu0 0
      %712 = vmatpush.bf16.msra.mxu0 %v691
      %713 = vmatpush.bf16.msra.mxu0 %v690
      %714 = vmatpush.bf16.msra.mxu0 %v689
      %715 = vmatpush.bf16.msra.mxu0 %v688
      %716 = vmatmul.bf16.gmra.mxu0 %v697
      %v717 = vpop.f32.mrf.mxu0
      %v718 = vadd.f32 0.0, %v717
      %v719 = vpop.f32.mrf.mxu0
      %v720 = vadd.f32 0.0, %v719
      %721 = vmatmul.bf16.gmra.mxu0 %v700
      %v722 = vpop.f32.mrf.mxu0
      %v723 = vadd.f32 0.0, %v722
      %v724 = vpop.f32.mrf.mxu0
      %v725 = vadd.f32 0.0, %v724
      %726 = vmatmul.bf16.gmra.mxu0 %v703
      %v727 = vpop.f32.mrf.mxu0
      %v728 = vadd.f32 0.0, %v727
      %v729 = vpop.f32.mrf.mxu0
      %v730 = vadd.f32 0.0, %v729
      %731 = vmatmul.bf16.gmra.mxu0 %v706
      %v732 = vpop.f32.mrf.mxu0
      %v733 = vadd.f32 0.0, %v732
      %v734 = vpop.f32.mrf.mxu0
      %v735 = vadd.f32 0.0, %v734
      %736 = vdwg.mxu0
      %v737 = vadd.f32 %v633, %v718
      %v738 = vadd.f32 %v635, %v720
      %v739 = vadd.f32 %v638, %v723
      %v740 = vadd.f32 %v640, %v725
      %v741 = vadd.f32 %v643, %v728
      %v742 = vadd.f32 %v645, %v730
      %v743 = vadd.f32 %v648, %v733
      %v744 = vadd.f32 %v650, %v735
      %v745 = vld [vmem:[%s237 + $0x60] sm:$0xf]
      %v746 = vld [vmem:[%s237 + $0x64] sm:$0xf]
      %v747 = vld [vmem:[%s237 + $0x68] sm:$0xf]
      %v748 = vld [vmem:[%s237 + $0x6c] sm:$0xf]
      %v749 = vld [vmem:[%s237 + $0x70] sm:$0xf]
      %v750 = vld [vmem:[%s237 + $0x74] sm:$0xf]
      %v751 = vld [vmem:[%s237 + $0x78] sm:$0xf]
      %v752 = vld [vmem:[%s237 + $0x7c] sm:$0xf]
      %v753 = vunpack.c.l.b16 %v271
      %v754 = vpack.c.b16 %v577, %v576
      %v755 = vpack.c.b16 %v579, %v578
      %v756 = vpack.c.b16 %v581, %v580
      %v757 = vpack.c.b16 %v753, %v582
      %v766 = vunpack.c.l.b16 %v745
      %v767 = vunpack.c.l.b16 %v746
      %v768 = vunpack.c.l.b16 %v747
      %v769 = vunpack.c.l.b16 %v748
      %v770 = vunpack.c.l.b16 %v749
      %v771 = vunpack.c.l.b16 %v750
      %v772 = vunpack.c.l.b16 %v751
      %v773 = vunpack.c.l.b16 %v752
      %v774 = vpack.c.b16 %v767, %v766
      %v775 = vpack.c.b16 %v769, %v768
      %v776 = vpack.c.b16 %v771, %v770
      %v777 = vpack.c.b16 %v773, %v772
      %v783 = vsel %vm533, %v754, 0
      %v786 = vsel %vm533, %v755, 0
      %v789 = vsel %vm533, %v756, 0
      %v792 = vsel %vm533, %v757, 0
      %794 = vmatpush.bf16.msra.mxu0 0
      %795 = vmatpush.bf16.msra.mxu0 0
      %796 = vmatpush.bf16.msra.mxu0 0
      %797 = vmatpush.bf16.msra.mxu0 0
      %798 = vmatpush.bf16.msra.mxu0 %v777
      %799 = vmatpush.bf16.msra.mxu0 %v776
      %800 = vmatpush.bf16.msra.mxu0 %v775
      %801 = vmatpush.bf16.msra.mxu0 %v774
      %802 = vmatmul.bf16.gmra.mxu0 %v783
      %v803 = vpop.f32.mrf.mxu0
      %v804 = vadd.f32 0.0, %v803
      %v805 = vpop.f32.mrf.mxu0
      %v806 = vadd.f32 0.0, %v805
      %807 = vmatmul.bf16.gmra.mxu0 %v786
      %v808 = vpop.f32.mrf.mxu0
      %v809 = vadd.f32 0.0, %v808
      %v810 = vpop.f32.mrf.mxu0
      %v811 = vadd.f32 0.0, %v810
      %812 = vmatmul.bf16.gmra.mxu0 %v789
      %v813 = vpop.f32.mrf.mxu0
      %v814 = vadd.f32 0.0, %v813
      %v815 = vpop.f32.mrf.mxu0
      %v816 = vadd.f32 0.0, %v815
      %817 = vmatmul.bf16.gmra.mxu0 %v792
      %v818 = vpop.f32.mrf.mxu0
      %v819 = vadd.f32 0.0, %v818
      %v820 = vpop.f32.mrf.mxu0
      %v821 = vadd.f32 0.0, %v820
      %822 = vdwg.mxu0
      %v823 = vadd.f32 %v737, %v804
      %v824 = vadd.f32 %v738, %v806
      %v825 = vadd.f32 %v739, %v809
      %v826 = vadd.f32 %v740, %v811
      %v827 = vadd.f32 %v741, %v814
      %v828 = vadd.f32 %v742, %v816
      %v829 = vadd.f32 %v743, %v819
      %v830 = vadd.f32 %v744, %v821
      %v831 = vld [vmem:[%s237 + $0x80] sm:$0xf]
      %v832 = vld [vmem:[%s237 + $0x84] sm:$0xf]
      %v833 = vld [vmem:[%s237 + $0x88] sm:$0xf]
      %v834 = vld [vmem:[%s237 + $0x8c] sm:$0xf]
      %v835 = vld [vmem:[%s237 + $0x90] sm:$0xf]
      %v836 = vld [vmem:[%s237 + $0x94] sm:$0xf]
      %v837 = vld [vmem:[%s237 + $0x98] sm:$0xf]
      %v838 = vld [vmem:[%s237 + $0x9c] sm:$0xf]
      %v839 = vunpack.c.l.b16 %v454
      %v840 = vpack.c.b16 %v499, %v498
      %v841 = vpack.c.b16 %v501, %v500
      %v842 = vpack.c.b16 %v503, %v502
      %v843 = vpack.c.b16 %v839, %v504
      %v852 = vunpack.c.l.b16 %v831
      %v853 = vunpack.c.l.b16 %v832
      %v854 = vunpack.c.l.b16 %v833
      %v855 = vunpack.c.l.b16 %v834
      %v856 = vunpack.c.l.b16 %v835
      %v857 = vunpack.c.l.b16 %v836
      %v858 = vunpack.c.l.b16 %v837
      %v859 = vunpack.c.l.b16 %v838
      %v860 = vpack.c.b16 %v853, %v852
      %v861 = vpack.c.b16 %v855, %v854
      %v862 = vpack.c.b16 %v857, %v856
      %v863 = vpack.c.b16 %v859, %v858
      %v869 = vsel %vm533, %v840, 0
      %v872 = vsel %vm533, %v841, 0
      %v875 = vsel %vm533, %v842, 0
      %v878 = vsel %vm533, %v843, 0
      %880 = vmatpush.bf16.msra.mxu0 0
      %881 = vmatpush.bf16.msra.mxu0 0
      %882 = vmatpush.bf16.msra.mxu0 0
      %883 = vmatpush.bf16.msra.mxu0 0
      %884 = vmatpush.bf16.msra.mxu0 %v863
      %885 = vmatpush.bf16.msra.mxu0 %v862
      %886 = vmatpush.bf16.msra.mxu0 %v861
      %887 = vmatpush.bf16.msra.mxu0 %v860
      %888 = vmatmul.bf16.gmra.mxu0 %v869
      %v889 = vpop.f32.mrf.mxu0
      %v890 = vadd.f32 0.0, %v889
      %v891 = vpop.f32.mrf.mxu0
      %v892 = vadd.f32 0.0, %v891
      %893 = vmatmul.bf16.gmra.mxu0 %v872
      %v894 = vpop.f32.mrf.mxu0
      %v895 = vadd.f32 0.0, %v894
      %v896 = vpop.f32.mrf.mxu0
      %v897 = vadd.f32 0.0, %v896
      %898 = vmatmul.bf16.gmra.mxu0 %v875
      %v899 = vpop.f32.mrf.mxu0
      %v900 = vadd.f32 0.0, %v899
      %v901 = vpop.f32.mrf.mxu0
      %v902 = vadd.f32 0.0, %v901
      %903 = vmatmul.bf16.gmra.mxu0 %v878
      %v904 = vpop.f32.mrf.mxu0
      %v905 = vadd.f32 0.0, %v904
      %v906 = vpop.f32.mrf.mxu0
      %v907 = vadd.f32 0.0, %v906
      %908 = vdwg.mxu0
      %v909 = vadd.f32 %v823, %v890
      %v910 = vadd.f32 %v824, %v892
      %v911 = vadd.f32 %v825, %v895
      %v912 = vadd.f32 %v826, %v897
      %v913 = vadd.f32 %v827, %v900
      %v914 = vadd.f32 %v828, %v902
      %v915 = vadd.f32 %v829, %v905
      %v916 = vadd.f32 %v830, %v907
      %v917 = vld [vmem:[%s237 + $0xa0] sm:$0xf]
      %v918 = vld [vmem:[%s237 + $0xa4] sm:$0xf]
      %v919 = vld [vmem:[%s237 + $0xa8] sm:$0xf]
      %v920 = vld [vmem:[%s237 + $0xac] sm:$0xf]
      %v921 = vld [vmem:[%s237 + $0xb0] sm:$0xf]
      %v922 = vld [vmem:[%s237 + $0xb4] sm:$0xf]
      %v923 = vld [vmem:[%s237 + $0xb8] sm:$0xf]
      %v924 = vld [vmem:[%s237 + $0xbc] sm:$0xf]
      %v925 = vunpack.c.l.b16 %v460
      %v926 = vpack.c.b16 %v662, %v661
      %v927 = vpack.c.b16 %v664, %v663
      %v928 = vpack.c.b16 %v666, %v665
      %v929 = vpack.c.b16 %v925, %v667
      %v938 = vunpack.c.l.b16 %v917
      %v939 = vunpack.c.l.b16 %v918
      %v940 = vunpack.c.l.b16 %v919
      %v941 = vunpack.c.l.b16 %v920
      %v942 = vunpack.c.l.b16 %v921
      %v943 = vunpack.c.l.b16 %v922
      %v944 = vunpack.c.l.b16 %v923
      %v945 = vunpack.c.l.b16 %v924
      %v946 = vpack.c.b16 %v939, %v938
      %v947 = vpack.c.b16 %v941, %v940
      %v948 = vpack.c.b16 %v943, %v942
      %v949 = vpack.c.b16 %v945, %v944
      %v955 = vsel %vm533, %v926, 0
      %v958 = vsel %vm533, %v927, 0
      %v961 = vsel %vm533, %v928, 0
      %v964 = vsel %vm533, %v929, 0
      %966 = vmatpush.bf16.msra.mxu0 0
      %967 = vmatpush.bf16.msra.mxu0 0
      %968 = vmatpush.bf16.msra.mxu0 0
      %969 = vmatpush.bf16.msra.mxu0 0
      %970 = vmatpush.bf16.msra.mxu0 %v949
      %971 = vmatpush.bf16.msra.mxu0 %v948
      %972 = vmatpush.bf16.msra.mxu0 %v947
      %973 = vmatpush.bf16.msra.mxu0 %v946
      %974 = vmatmul.bf16.gmra.mxu0 %v955
      %v975 = vpop.f32.mrf.mxu0
      %v976 = vadd.f32 0.0, %v975
      %v977 = vpop.f32.mrf.mxu0
      %v978 = vadd.f32 0.0, %v977
      %979 = vmatmul.bf16.gmra.mxu0 %v958
      %v980 = vpop.f32.mrf.mxu0
      %v981 = vadd.f32 0.0, %v980
      %v982 = vpop.f32.mrf.mxu0
      %v983 = vadd.f32 0.0, %v982
      %984 = vmatmul.bf16.gmra.mxu0 %v961
      %v985 = vpop.f32.mrf.mxu0
      %v986 = vadd.f32 0.0, %v985
      %v987 = vpop.f32.mrf.mxu0
      %v988 = vadd.f32 0.0, %v987
      %989 = vmatmul.bf16.gmra.mxu0 %v964
      %v990 = vpop.f32.mrf.mxu0
      %v991 = vadd.f32 0.0, %v990
      %v992 = vpop.f32.mrf.mxu0
      %v993 = vadd.f32 0.0, %v992
      %994 = vdwg.mxu0
      %v995 = vadd.f32 %v909, %v976
      %v996 = vadd.f32 %v910, %v978
      %v997 = vadd.f32 %v911, %v981
      %v998 = vadd.f32 %v912, %v983
      %v999 = vadd.f32 %v913, %v986
      %v1000 = vadd.f32 %v914, %v988
      %v1001 = vadd.f32 %v915, %v991
      %v1002 = vadd.f32 %v916, %v993
      %v1003 = vld [vmem:[%s237 + $0xc0] sm:$0xf]
      %v1004 = vld [vmem:[%s237 + $0xc4] sm:$0xf]
      %v1005 = vld [vmem:[%s237 + $0xc8] sm:$0xf]
      %v1006 = vld [vmem:[%s237 + $0xcc] sm:$0xf]
      %v1007 = vld [vmem:[%s237 + $0xd0] sm:$0xf]
      %v1008 = vld [vmem:[%s237 + $0xd4] sm:$0xf]
      %v1009 = vld [vmem:[%s237 + $0xd8] sm:$0xf]
      %v1010 = vld [vmem:[%s237 + $0xdc] sm:$0xf]
      %v1011 = vunpack.c.l.b16 %v273
      %v1012 = vpack.c.b16 %v1011, %v753
      %v1021 = vunpack.c.l.b16 %v1003
      %v1022 = vunpack.c.l.b16 %v1004
      %v1023 = vunpack.c.l.b16 %v1005
      %v1024 = vunpack.c.l.b16 %v1006
      %v1025 = vunpack.c.l.b16 %v1007
      %v1026 = vunpack.c.l.b16 %v1008
      %v1027 = vunpack.c.l.b16 %v1009
      %v1028 = vunpack.c.l.b16 %v1010
      %v1029 = vpack.c.b16 %v1022, %v1021
      %v1030 = vpack.c.b16 %v1024, %v1023
      %v1031 = vpack.c.b16 %v1026, %v1025
      %v1032 = vpack.c.b16 %v1028, %v1027
      %v1038 = vsel %vm533, %v1012, 0
      %1040 = vmatpush.bf16.msra.mxu0 0
      %1041 = vmatpush.bf16.msra.mxu0 0
      %1042 = vmatpush.bf16.msra.mxu0 0
      %1043 = vmatpush.bf16.msra.mxu0 0
      %1044 = vmatpush.bf16.msra.mxu0 %v1032
      %1045 = vmatpush.bf16.msra.mxu0 %v1031
      %1046 = vmatpush.bf16.msra.mxu0 %v1030
      %1047 = vmatpush.bf16.msra.mxu0 %v1029
      %1048 = vmatmul.bf16.gmra.mxu0 %v615
      %v1049 = vpop.f32.mrf.mxu0
      %v1050 = vadd.f32 0.0, %v1049
      %v1051 = vpop.f32.mrf.mxu0
      %v1052 = vadd.f32 0.0, %v1051
      %1053 = vmatmul.bf16.gmra.mxu0 %v618
      %v1054 = vpop.f32.mrf.mxu0
      %v1055 = vadd.f32 0.0, %v1054
      %v1056 = vpop.f32.mrf.mxu0
      %v1057 = vadd.f32 0.0, %v1056
      %1058 = vmatmul.bf16.gmra.mxu0 %v621
      %v1059 = vpop.f32.mrf.mxu0
      %v1060 = vadd.f32 0.0, %v1059
      %v1061 = vpop.f32.mrf.mxu0
      %v1062 = vadd.f32 0.0, %v1061
      %1063 = vmatmul.bf16.gmra.mxu0 %v1038
      %v1064 = vpop.f32.mrf.mxu0
      %v1065 = vadd.f32 0.0, %v1064
      %v1066 = vpop.f32.mrf.mxu0
      %v1067 = vadd.f32 0.0, %v1066
      %1068 = vdwg.mxu0
      %v1069 = vadd.f32 %v995, %v1050
      %v1070 = vadd.f32 %v996, %v1052
      %v1071 = vadd.f32 %v997, %v1055
      %v1072 = vadd.f32 %v998, %v1057
      %v1073 = vadd.f32 %v999, %v1060
      %v1074 = vadd.f32 %v1000, %v1062
      %v1075 = vadd.f32 %v1001, %v1065
      %v1076 = vadd.f32 %v1002, %v1067
      %v1077 = vld [vmem:[%s237 + $0xe0] sm:$0xf]
      %v1078 = vld [vmem:[%s237 + $0xe4] sm:$0xf]
      %v1079 = vld [vmem:[%s237 + $0xe8] sm:$0xf]
      %v1080 = vld [vmem:[%s237 + $0xec] sm:$0xf]
      %v1081 = vld [vmem:[%s237 + $0xf0] sm:$0xf]
      %v1082 = vld [vmem:[%s237 + $0xf4] sm:$0xf]
      %v1083 = vld [vmem:[%s237 + $0xf8] sm:$0xf]
      %v1084 = vld [vmem:[%s237 + $0xfc] sm:$0xf]
      %v1085 = vunpack.c.l.b16 %v474
      %v1086 = vpack.c.b16 %v1085, %v839
      %v1095 = vunpack.c.l.b16 %v1077
      %v1096 = vunpack.c.l.b16 %v1078
      %v1097 = vunpack.c.l.b16 %v1079
      %v1098 = vunpack.c.l.b16 %v1080
      %v1099 = vunpack.c.l.b16 %v1081
      %v1100 = vunpack.c.l.b16 %v1082
      %v1101 = vunpack.c.l.b16 %v1083
      %v1102 = vunpack.c.l.b16 %v1084
      %v1103 = vpack.c.b16 %v1096, %v1095
      %v1104 = vpack.c.b16 %v1098, %v1097
      %v1105 = vpack.c.b16 %v1100, %v1099
      %v1106 = vpack.c.b16 %v1102, %v1101
      %v1112 = vsel %vm533, %v1086, 0
      %1114 = vmatpush.bf16.msra.mxu0 0
      %1115 = vmatpush.bf16.msra.mxu0 0
      %1116 = vmatpush.bf16.msra.mxu0 0
      %1117 = vmatpush.bf16.msra.mxu0 0
      %1118 = vmatpush.bf16.msra.mxu0 %v1106
      %1119 = vmatpush.bf16.msra.mxu0 %v1105
      %1120 = vmatpush.bf16.msra.mxu0 %v1104
      %1121 = vmatpush.bf16.msra.mxu0 %v1103
      %1122 = vmatmul.bf16.gmra.mxu0 %v538
      %v1123 = vpop.f32.mrf.mxu0
      %v1124 = vadd.f32 0.0, %v1123
      %v1125 = vpop.f32.mrf.mxu0
      %v1126 = vadd.f32 0.0, %v1125
      %1127 = vmatmul.bf16.gmra.mxu0 %v541
      %v1128 = vpop.f32.mrf.mxu0
      %v1129 = vadd.f32 0.0, %v1128
      %v1130 = vpop.f32.mrf.mxu0
      %v1131 = vadd.f32 0.0, %v1130
      %1132 = vmatmul.bf16.gmra.mxu0 %v544
      %v1133 = vpop.f32.mrf.mxu0
      %v1134 = vadd.f32 0.0, %v1133
      %v1135 = vpop.f32.mrf.mxu0
      %v1136 = vadd.f32 0.0, %v1135
      %1137 = vmatmul.bf16.gmra.mxu0 %v1112
      %v1138 = vpop.f32.mrf.mxu0
      %v1139 = vadd.f32 0.0, %v1138
      %v1140 = vpop.f32.mrf.mxu0
      %v1141 = vadd.f32 0.0, %v1140
      %1142 = vdwg.mxu0
      %v1143 = vadd.f32 %v1069, %v1124
      %v1144 = vadd.f32 %v1070, %v1126
      %v1145 = vadd.f32 %v1071, %v1129
      %v1146 = vadd.f32 %v1072, %v1131
      %v1147 = vadd.f32 %v1073, %v1134
      %v1148 = vadd.f32 %v1074, %v1136
      %v1149 = vadd.f32 %v1075, %v1139
      %v1150 = vadd.f32 %v1076, %v1141
      %v1151 = vld [vmem:[%s237 + $0x100] sm:$0xf]
      %v1152 = vld [vmem:[%s237 + $0x104] sm:$0xf]
      %v1153 = vld [vmem:[%s237 + $0x108] sm:$0xf]
      %v1154 = vld [vmem:[%s237 + $0x10c] sm:$0xf]
      %v1155 = vld [vmem:[%s237 + $0x110] sm:$0xf]
      %v1156 = vld [vmem:[%s237 + $0x114] sm:$0xf]
      %v1157 = vld [vmem:[%s237 + $0x118] sm:$0xf]
      %v1158 = vld [vmem:[%s237 + $0x11c] sm:$0xf]
      %v1159 = vunpack.c.l.b16 %v480
      %v1160 = vpack.c.b16 %v1159, %v925
      %v1169 = vunpack.c.l.b16 %v1151
      %v1170 = vunpack.c.l.b16 %v1152
      %v1171 = vunpack.c.l.b16 %v1153
      %v1172 = vunpack.c.l.b16 %v1154
      %v1173 = vunpack.c.l.b16 %v1155
      %v1174 = vunpack.c.l.b16 %v1156
      %v1175 = vunpack.c.l.b16 %v1157
      %v1176 = vunpack.c.l.b16 %v1158
      %v1177 = vpack.c.b16 %v1170, %v1169
      %v1178 = vpack.c.b16 %v1172, %v1171
      %v1179 = vpack.c.b16 %v1174, %v1173
      %v1180 = vpack.c.b16 %v1176, %v1175
      %v1186 = vsel %vm533, %v1160, 0
      %1188 = vmatpush.bf16.msra.mxu0 0
      %1189 = vmatpush.bf16.msra.mxu0 0
      %1190 = vmatpush.bf16.msra.mxu0 0
      %1191 = vmatpush.bf16.msra.mxu0 0
      %1192 = vmatpush.bf16.msra.mxu0 %v1180
      %1193 = vmatpush.bf16.msra.mxu0 %v1179
      %1194 = vmatpush.bf16.msra.mxu0 %v1178
      %1195 = vmatpush.bf16.msra.mxu0 %v1177
      %1196 = vmatmul.bf16.gmra.mxu0 %v700
      %v1197 = vpop.f32.mrf.mxu0
      %v1198 = vadd.f32 0.0, %v1197
      %v1199 = vpop.f32.mrf.mxu0
      %v1200 = vadd.f32 0.0, %v1199
      %1201 = vmatmul.bf16.gmra.mxu0 %v703
      %v1202 = vpop.f32.mrf.mxu0
      %v1203 = vadd.f32 0.0, %v1202
      %v1204 = vpop.f32.mrf.mxu0
      %v1205 = vadd.f32 0.0, %v1204
      %1206 = vmatmul.bf16.gmra.mxu0 %v706
      %v1207 = vpop.f32.mrf.mxu0
      %v1208 = vadd.f32 0.0, %v1207
      %v1209 = vpop.f32.mrf.mxu0
      %v1210 = vadd.f32 0.0, %v1209
      %1211 = vmatmul.bf16.gmra.mxu0 %v1186
      %v1212 = vpop.f32.mrf.mxu0
      %v1213 = vadd.f32 0.0, %v1212
      %v1214 = vpop.f32.mrf.mxu0
      %v1215 = vadd.f32 0.0, %v1214
      %1216 = vdwg.mxu0
      %v1217 = vadd.f32 %v1143, %v1198
      %v1218 = vadd.f32 %v1144, %v1200
      %v1219 = vadd.f32 %v1145, %v1203
      %v1220 = vadd.f32 %v1146, %v1205
      %v1221 = vadd.f32 %v1147, %v1208
      %v1222 = vadd.f32 %v1148, %v1210
      %v1223 = vadd.f32 %v1149, %v1213
      %v1224 = vadd.f32 %v1150, %v1215
      %v1225 = vld [vmem:[%s240] sm:$0x1]
      %v1227 = vperm.slane %v1225, 0
      %v1229 = vadd.f32 %v1217, %v1227
      %v1230 = vadd.f32 %v1218, %v1227
      %v1231 = vadd.f32 %v1219, %v1227
      %v1232 = vadd.f32 %v1220, %v1227
      %v1233 = vadd.f32 %v1221, %v1227
      %v1234 = vadd.f32 %v1222, %v1227
      %v1235 = vadd.f32 %v1223, %v1227
      %v1236 = vadd.f32 %v1224, %v1227
      %v1237 = vmax.f32 %v1229, 0.0
      %v1238 = vmax.f32 %v1230, 0.0
      %v1239 = vmax.f32 %v1231, 0.0
      %v1240 = vmax.f32 %v1232, 0.0
      %v1241 = vmax.f32 %v1233, 0.0
      %v1242 = vmax.f32 %v1234, 0.0
      %v1243 = vmax.f32 %v1235, 0.0
      %v1244 = vmax.f32 %v1236, 0.0
      %v1245 = vpack.c.bf16 %v1237, %v1237
      %v1246 = vpack.c.bf16 %v1238, %v1238
      %v1247 = vpack.c.bf16 %v1239, %v1239
      %v1248 = vpack.c.bf16 %v1240, %v1240
      %v1249 = vpack.c.bf16 %v1241, %v1241
      %v1250 = vpack.c.bf16 %v1242, %v1242
      %v1251 = vpack.c.bf16 %v1243, %v1243
      %v1252 = vpack.c.bf16 %v1244, %v1244
      %1253 = vst [vmem:[%s252] sm:$0xf] %v1245
      %1254 = vst [vmem:[%s252 + $0x4] sm:$0xf] %v1246
      %1255 = vst [vmem:[%s252 + $0x8] sm:$0xf] %v1247
      %1256 = vst [vmem:[%s252 + $0xc] sm:$0xf] %v1248
      %1257 = vst [vmem:[%s252 + $0x10] sm:$0xf] %v1249
      %1258 = vst [vmem:[%s252 + $0x14] sm:$0xf] %v1250
      %1259 = vst [vmem:[%s252 + $0x18] sm:$0xf] %v1251
      %1260 = vst [vmem:[%s252 + $0x1c] sm:$0xf] %v1252
      %s1261 = smul.u32 8, %s20
      %p1262 = scmp.lt.s32.totalorder %s19, 1
      %s1263 = scalar_select %p1262, %s19, 1
      %p1264 = scmp.lt.s32.totalorder %s1261, 7
      %s1265 = scalar_select %p1264, %s1261, 7
      %p1266 = scmp.lt.s32.totalorder %s21, 0
      %s1267 = scalar_select %p1266, %s21, 0
      %s1268 = sadd.s32 %s1267, %s1265
      %s1269 = smul.addr %s1263, 8
      %s1270 = sadd.s32 %s1268, %s1269
      %s1271 = smul.addr %s1270, 4
      %s1272 = scalar_lea.vmem %s3, %s1271
      // Predicated region
      $region33: #{down_forward.2} parent=31 // pred_check
        %p1273 = pneg %p135
      $region34: #{down_forward.2} parent=31 // pred_check_branch
        %1275 = sbr.rel (%p1273) target = $region36
      $region35: #{down_forward.2} parent=31 // pred_region
        %s1276 = smul.u32 8, %s20
      $region36: #{down_forward.2} parent=31 // pred_fallthru
        _
    $region32: #{down_forward.2} parent=5 // pred_fallthru
      _
    %p1277 = scmp.le.s32.totalorder 2, %s9
    // Predicated region
    $region37: #{down_forward.2} parent=5 // pred_check
      %p1278 = pneg %p1277
    $region38: #{down_forward.2} parent=5 // pred_check_branch
      %1280 = sbr.rel (%p1278) target = $region40
    $region39: #{down_forward.2} parent=5 // pred_region
      %s1281 = ssub.s32 %s9, 2
      // Predicated region
      $region41: #{down_forward.2} parent=39 // pred_check
        %p1282 = pneg %p141
      $region42: #{down_forward.2} parent=39 // pred_check_branch
        %1284 = sbr.rel (%p1282) target = $region44
      $region43: #{down_forward.2} parent=39 // pred_region
        %s1285 = smul.u32 8, %s23
        %p1286 = scmp.lt.s32.totalorder %s22, 1
        %s1287 = scalar_select %p1286, %s22, 1
        %p1288 = scmp.lt.s32.totalorder %s1285, 7
        %s1289 = scalar_select %p1288, %s1285, 7
        %p1290 = scmp.lt.s32.totalorder %s24, 0
        %s1291 = scalar_select %p1290, %s24, 0
        %s1292 = sadd.s32 %s1291, %s1289
        %s1293 = smul.addr %s1287, 8
        %s1294 = sadd.s32 %s1292, %s1293
        %s1295 = smul.addr %s1294, 4
        %s1296 = scalar_lea.vmem %s3, %s1295
      $region44: #{down_forward.2} parent=39 // pred_fallthru
        _
    $region40: #{down_forward.2} parent=5 // pred_fallthru
      _
  $region6: #{down_forward.2} parent=0 // loop_footer
    %s13 = sadd.s32 1, %s9
  $region7: #{down_forward.2} parent=0 // loop_footer_branch
    %8 = sbr.rel target = $region3
  $region8: #{down_forward.2} parent=0 // loop_exit
    _

// kernel: down_forward.3
$region0: #{down_forward.3}
  #allocation0 [shape = 'u32[]', space=smem, size = 0x4, offset = 0x4, fixed_abs, tag = 'smem constant byte address 0x4 - core index']
  #allocation1 [shape = 'u32[72,128]{1,0:T(1,128)}', space=vmem, size = 0x9000, scoped, tag = 'internal scratch']
  %s0 = inlined_call_operand.vmem [shape: bf16[2,1,10,10,128], index: 0, kind: input, shape index: {}]
  %s1 = inlined_call_operand.vmem [shape: bf16[1152,128], index: 1, kind: input, shape index: {}]
  %s2 = inlined_call_operand.vmem [shape: f32[1,128], index: 2, kind: input, shape index: {}]
  %s3 = inlined_call_operand.hbm [shape: f32[2,64,128], index: 3, kind: output, shape index: {}]
  %s4 = sld [smem:[#allocation0]]
  $region45: #{down_forward.3} parent=0
    _
  %s6 = ssub.s32 1, %s4
  %s7 = scalar_select 0, %s6, %s4
  $region1: #{down_forward.3} parent=0
    #allocation2 [shape = 'u8[65536]{0}', space=vmem, size = 0x10000, scoped, tag = 'output window, operand 0']
    #allocation3 [shape = 's32[2]{0}', space=sflag, size = 0x8, scoped, tag = 'scoped memory for down_forward.3']
    %8 = vsyncpa [#allocation3], 0
    %s9 = scalar_lea.sflag [#allocation3], 1
    %10 = vsyncpa %s9, 0
    loop: start=0, step=1, limit=4
    $region2: #{down_forward.3} parent=1 // loop_pre_header
      _
    $region3: #{down_forward.3} parent=1 // loop_header
      %s12 = sphi 0, %s16
      %p13 = scmp.ge.s32.totalorder %s12, 4
      %s19 = sphi 0, %s38
      %s20 = sphi 0, %s34
      %s21 = sphi 0, %s30
      %s22 = sphi 0, %s19
      %s23 = sphi 0, %s20
      %s24 = sphi 0, %s21
      %s25 = sphi 0, %s22
      %s26 = sphi 0, %s23
      %s27 = sphi 0, %s24
      %s43 = sphi 0, %s45
      %s46 = sphi 0, %s43
      %s47 = sphi 0, %s46
      %s63 = sphi 0, %s47
      %s69 = sphi 0, %s71
      %s72 = sphi 0, %s69
      %s73 = sphi 0, %s72
      %s89 = sphi 0, %s73
      %s95 = sphi 0, %s97
      %s98 = sphi 0, %s95
      %s99 = sphi 0, %s98
      %s115 = sphi 0, %s99
      %s125 = sphi 0, %s127
      %s128 = sphi 0, %s125
      %s129 = sphi 0, %s128
      %s145 = sphi 0, %s129
    $region4: #{down_forward.3} parent=1 // loop_header_branch
      %15 = sbr.rel (%p13) target = $region8
    $region5: #{down_forward.3} parent=1 // loop_body
      %s17 = ssub.s32 %s12, 1
      %s18 = ssub.s32 %s12, 2
      %s28 = sadd.s32 1, %s21
      %p29 = scmp.ge.s32.totalorder %s28, 1
      %s30 = scalar_select %p29, 0, %s28
      %s31 = sadd.s32 1, %s20
      %s32 = scalar_select %p29, %s31, %s20
      %p33 = scmp.ge.s32.totalorder %s32, 1
      %s34 = scalar_select %p33, 0, %s32
      %s35 = sadd.s32 1, %s19
      %s36 = scalar_select %p33, %s35, %s19
      %p37 = scmp.ge.s32.totalorder %s36, 2
      %s38 = scalar_select %p37, 0, %s36
      %s39 = ssub.s32 %s19, %s38
      %s40 = ssub.s32 %s20, %s34
      %s41 = sor.u32 %s39, %s40
      %p42 = scmp.eq.s32.totalorder %s41, 0
      %s44 = sadd.s32 %s43, 1
      %s45 = scalar_select %p42, %s43, %s44
      %p48 = pneg %p42
      %p49 = scmp.eq.s32.totalorder %s12, 1
      %p50 = por %p48, %p49
      %p51 = scmp.ne.s32.totalorder %s43, %s46
      %p52 = scmp.eq.s32.totalorder %s12, 0
      %p53 = por %p51, %p52
      %p54 = scmp.ne.s32.totalorder %s43, %s46
      %p55 = scmp.eq.s32.totalorder %s17, 1
      %p56 = por %p54, %p55
      %p57 = scmp.ne.s32.totalorder %s46, %s47
      %p58 = scmp.eq.s32.totalorder %s17, 0
      %p59 = por %p57, %p58
      %p60 = scmp.ne.s32.totalorder %s46, %s47
      %p61 = scmp.eq.s32.totalorder %s18, 1
      %p62 = por %p60, %p61
      %p64 = scmp.ne.s32.totalorder %s47, %s63
      %p65 = scmp.eq.s32.totalorder %s18, 0
      %p66 = por %p64, %p65
      %s67 = ssub.s32 %s21, %s30
      %p68 = scmp.eq.s32.totalorder %s67, 0
      %s70 = sadd.s32 %s69, 1
      %s71 = scalar_select %p68, %s69, %s70
      %p74 = pneg %p68
      %p75 = scmp.eq.s32.totalorder %s12, 1
      %p76 = por %p74, %p75
      %p77 = scmp.ne.s32.totalorder %s69, %s72
      %p78 = scmp.eq.s32.totalorder %s12, 0
      %p79 = por %p77, %p78
      %p80 = scmp.ne.s32.totalorder %s69, %s72
      %p81 = scmp.eq.s32.totalorder %s17, 1
      %p82 = por %p80, %p81
      %p83 = scmp.ne.s32.totalorder %s72, %s73
      %p84 = scmp.eq.s32.totalorder %s17, 0
      %p85 = por %p83, %p84
      %p86 = scmp.ne.s32.totalorder %s72, %s73
      %p87 = scmp.eq.s32.totalorder %s18, 1
      %p88 = por %p86, %p87
      %p90 = scmp.ne.s32.totalorder %s73, %s89
      %p91 = scmp.eq.s32.totalorder %s18, 0
      %p92 = por %p90, %p91
      %s93 = ssub.s32 %s21, %s30
      %p94 = scmp.eq.s32.totalorder %s93, 0
      %s96 = sadd.s32 %s95, 1
      %s97 = scalar_select %p94, %s95, %s96
      %p100 = pneg %p94
      %p101 = scmp.eq.s32.totalorder %s12, 1
      %p102 = por %p100, %p101
      %p103 = scmp.ne.s32.totalorder %s95, %s98
      %p104 = scmp.eq.s32.totalorder %s12, 0
      %p105 = por %p103, %p104
      %p106 = scmp.ne.s32.totalorder %s95, %s98
      %p107 = scmp.eq.s32.totalorder %s17, 1
      %p108 = por %p106, %p107
      %p109 = scmp.ne.s32.totalorder %s98, %s99
      %p110 = scmp.eq.s32.totalorder %s17, 0
      %p111 = por %p109, %p110
      %p112 = scmp.ne.s32.totalorder %s98, %s99
      %p113 = scmp.eq.s32.totalorder %s18, 1
      %p114 = por %p112, %p113
      %p116 = scmp.ne.s32.totalorder %s99, %s115
      %p117 = scmp.eq.s32.totalorder %s18, 0
      %p118 = por %p116, %p117
      %s119 = ssub.s32 %s19, %s38
      %s120 = ssub.s32 %s20, %s34
      %s121 = sor.u32 %s119, %s120
      %s122 = ssub.s32 %s21, %s30
      %s123 = sor.u32 %s121, %s122
      %p124 = scmp.eq.s32.totalorder %s123, 0
      %s126 = sadd.s32 %s125, 1
      %s127 = scalar_select %p124, %s125, %s126
      %p130 = pneg %p124
      %p131 = scmp.eq.s32.totalorder %s12, 1
      %p132 = por %p130, %p131
      %p133 = scmp.ne.s32.totalorder %s125, %s128
      %p134 = scmp.eq.s32.totalorder %s12, 0
      %p135 = por %p133, %p134
      %p136 = scmp.ne.s32.totalorder %s125, %s128
      %p137 = scmp.eq.s32.totalorder %s17, 1
      %p138 = por %p136, %p137
      %p139 = scmp.ne.s32.totalorder %s128, %s129
      %p140 = scmp.eq.s32.totalorder %s17, 0
      %p141 = por %p139, %p140
      %p142 = scmp.ne.s32.totalorder %s128, %s129
      %p143 = scmp.eq.s32.totalorder %s18, 1
      %p144 = por %p142, %p143
      %p146 = scmp.ne.s32.totalorder %s129, %s145
      %p147 = scmp.eq.s32.totalorder %s18, 0
      %p148 = por %p146, %p147
      %p149 = scmp.le.s32.totalorder 1, %s12
      %p150 = scmp.lt.s32.totalorder %s12, 3
      %p151 = pnand %p149, %p150
      %p152 = pneg %p151
      // Predicated region
      $region9: #{down_forward.3} parent=5 // pred_check
        _
      $region10: #{down_forward.3} parent=5 // pred_check_branch
        %154 = sbr.rel (%p151) target = $region12
      $region11: #{down_forward.3} parent=5 // pred_region
        %s155 = ssub.s32 %s12, 1
        // Predicated region
        $region13: #{down_forward.3} parent=11 // pred_check
          %p156 = pneg %p85
        $region14: #{down_forward.3} parent=11 // pred_check_branch
          %158 = sbr.rel (%p156) target = $region16
        $region15: #{down_forward.3} parent=11 // pred_region
          %p159 = scmp.lt.s32.totalorder %s24, 0
          %s160 = scalar_select %p159, %s24, 0
          %s161 = smul.addr %s160, 4
          %s162 = scalar_lea.vmem %s1, %s161
        $region16: #{down_forward.3} parent=11 // pred_fallthru
          _
        // Predicated region
        $region17: #{down_forward.3} parent=11 // pred_check
          %p163 = pneg %p111
        $region18: #{down_forward.3} parent=11 // pred_check_branch
          %165 = sbr.rel (%p163) target = $region20
        $region19: #{down_forward.3} parent=11 // pred_region
          %p166 = scmp.lt.s32.totalorder %s24, 0
          %s167 = scalar_select %p166, %s24, 0
          %s168 = scalar_lea.vmem %s2, %s167
        $region20: #{down_forward.3} parent=11 // pred_fallthru
          _
      $region12: #{down_forward.3} parent=5 // pred_fallthru
        _
      %p169 = scmp.lt.s32.totalorder %s12, 2
      // Predicated region
      $region21: #{down_forward.3} parent=5 // pred_check
        %p170 = pneg %p169
      $region22: #{down_forward.3} parent=5 // pred_check_branch
        %172 = sbr.rel (%p170) target = $region24
      $region23: #{down_forward.3} parent=5 // pred_region
        // Predicated region
        $region25: #{down_forward.3} parent=23 // pred_check
          %p173 = pneg %p53
        $region26: #{down_forward.3} parent=23 // pred_check_branch
          %175 = sbr.rel (%p173) target = $region28
        $region27: #{down_forward.3} parent=23 // pred_region
          %p176 = scmp.lt.s32.totalorder %s19, 1
          %s177 = scalar_select %p176, %s19, 1
          %p178 = scmp.lt.s32.totalorder %s20, 0
          %s179 = scalar_select %p178, %s20, 0
          %s180 = smul.addr %s179, 20
          %s181 = smul.addr %s177, 20
          %s182 = sadd.s32 %s180, %s181
          %s183 = smul.addr %s182, 4
          %s184 = scalar_lea.vmem %s0, %s183
        $region28: #{down_forward.3} parent=23 // pred_fallthru
          _
      $region24: #{down_forward.3} parent=5 // pred_fallthru
        _
      %p185 = scmp.le.s32.totalorder 1, %s12
      %p186 = scmp.lt.s32.totalorder %s12, 3
      %p187 = pnand %p185, %p186
      %p188 = pneg %p187
      // Predicated region
      $region29: #{down_forward.3} parent=5 // pred_check
        _
      $region30: #{down_forward.3} parent=5 // pred_check_branch
        %190 = sbr.rel (%p187) target = $region32
      $region31: #{down_forward.3} parent=5 // pred_region
        %s191 = ssub.s32 %s12, 1
        %p192 = scmp.lt.s32.totalorder %s22, 1
        %s193 = scalar_select %p192, %s22, 1
        %p194 = scmp.lt.s32.totalorder %s23, 0
        %s195 = scalar_select %p194, %s23, 0
        %s196 = smul.addr %s195, 20
        %s197 = smul.addr %s193, 20
        %s198 = sadd.s32 %s196, %s197
        %s199 = smul.addr %s198, 4
        %s200 = scalar_lea.vmem %s0, %s199
        %p201 = pneg %p59
        %p202 = pneg %p56
        %p203 = scmp.lt.s32.totalorder %s24, 0
        %s204 = scalar_select %p203, %s24, 0
        %s205 = smul.addr %s204, 4
        %s206 = scalar_lea.vmem %s1, %s205
        %p207 = pneg %p85
        %p208 = pneg %p82
        %p209 = scmp.lt.s32.totalorder %s24, 0
        %s210 = scalar_select %p209, %s24, 0
        %s211 = scalar_lea.vmem %s2, %s210
        %p212 = pneg %p111
        %p213 = pneg %p108
        %p214 = pneg %p141
        %p215 = pneg %p138
        %s216 = sand.u32 %s128, 1
        %s217 = scalar_lea.sflag [#allocation3], %s216
        %s218 = sand.u32 %s128, 1
        %s219 = smul.addr %s218, 64
        %s220 = scalar_lea.vmem [#allocation2], %s219
        %p221 = scmp.lt.s32.totalorder %s22, 1
        %s222 = scalar_select %p221, %s22, 1
        %p223 = scmp.lt.s32.totalorder %s23, 0
        %s224 = scalar_select %p223, %s23, 0
        %s225 = smul.addr %s224, 20
        %s226 = smul.addr %s222, 20
        %s227 = sadd.s32 %s225, %s226
        %s228 = smul.addr %s227, 4
        %s229 = scalar_lea.vmem %s0, %s228
        %p230 = scmp.lt.s32.totalorder %s24, 0
        %s231 = scalar_select %p230, %s24, 0
        %s232 = smul.addr %s231, 4
        %s233 = scalar_lea.vmem %s1, %s232
        %p234 = scmp.lt.s32.totalorder %s24, 0
        %s235 = scalar_select %p234, %s24, 0
        %s236 = scalar_lea.vmem %s2, %s235
        %s237 = smul.u32 8, %s23
        %v238 = vld [vmem:[%s229] sm:$0xf]
        %v239 = vld [vmem:[%s229 + $0x4] sm:$0x1]
        %v240 = vld [vmem:[%s229 + $0x8] sm:$0xf]
        %v241 = vld [vmem:[%s229 + $0xc] sm:$0x1]
        %v242 = vld [vmem:[%s229 + $0x10] sm:$0xf]
        %v243 = vld [vmem:[%s229 + $0x14] sm:$0x1]
        %v244 = vld [vmem:[%s229 + $0x18] sm:$0xf]
        %v245 = vld [vmem:[%s229 + $0x1c] sm:$0x1]
        %v246 = vld [vmem:[%s229 + $0x20] sm:$0xf]
        %v247 = vld [vmem:[%s229 + $0x24] sm:$0x1]
        %v248 = vld [vmem:[%s229 + $0x28] sm:$0xf]
        %v249 = vld [vmem:[%s229 + $0x2c] sm:$0x1]
        %v250 = vld [vmem:[%s229 + $0x30] sm:$0xf]
        %v251 = vld [vmem:[%s229 + $0x34] sm:$0x1]
        %v252 = vld [vmem:[%s229 + $0x38] sm:$0xf]
        %v253 = vld [vmem:[%s229 + $0x3c] sm:$0x1]
        %v254 = vld [vmem:[%s229 + $0x40] sm:$0xf]
        %v255 = vld [vmem:[%s229 + $0x44] sm:$0x1]
        %v256 = vld [vmem:[%s229 + $0x48] sm:$0xf]
        %v257 = vld [vmem:[%s229 + $0x4c] sm:$0x1]
        %vm258 = vsmask.f32 3328
        %vm259 = vsmask.f32 7440
        %vm260 = vmor %vm258, %vm259
        %v262 = vshrl.u32 %v238, 16
        %v264 = vrot.slane %v262, 4
        %v265 = vshll.u32 %v238, 16
        %v267 = vrot.slane %v265, 5
        %v268 = vor.u32 %v264, %v267
        %v269 = vrot.slane %v268, 4
        %v271 = vshll.u32 %v239, 16
        %v273 = vrot.slane %v271, 5
        %v274 = vsel %vm260, %v269, %v273
        %v276 = vshrl.u32 %v240, 16
        %v278 = vrot.slane %v276, 4
        %v279 = vshll.u32 %v240, 16
        %v281 = vrot.slane %v279, 5
        %v282 = vor.u32 %v278, %v281
        %v283 = vrot.slane %v282, 4
        %v285 = vshll.u32 %v241, 16
        %v287 = vrot.slane %v285, 5
        %v288 = vsel %vm260, %v283, %v287
        %v290 = vshrl.u32 %v242, 16
        %v292 = vrot.slane %v290, 4
        %v293 = vshll.u32 %v242, 16
        %v295 = vrot.slane %v293, 5
        %v296 = vor.u32 %v292, %v295
        %v297 = vrot.slane %v296, 4
        %v299 = vshll.u32 %v243, 16
        %v301 = vrot.slane %v299, 5
        %v302 = vsel %vm260, %v297, %v301
        %v304 = vshrl.u32 %v244, 16
        %v306 = vrot.slane %v304, 4
        %v307 = vshll.u32 %v244, 16
        %v309 = vrot.slane %v307, 5
        %v310 = vor.u32 %v306, %v309
        %v311 = vrot.slane %v310, 4
        %v313 = vshll.u32 %v245, 16
        %v315 = vrot.slane %v313, 5
        %v316 = vsel %vm260, %v311, %v315
        %v318 = vshrl.u32 %v246, 16
        %v320 = vrot.slane %v318, 4
        %v321 = vshll.u32 %v246, 16
        %v323 = vrot.slane %v321, 5
        %v324 = vor.u32 %v320, %v323
        %v325 = vrot.slane %v324, 4
        %v327 = vshll.u32 %v247, 16
        %v329 = vrot.slane %v327, 5
        %v330 = vsel %vm260, %v325, %v329
        %v332 = vshrl.u32 %v248, 16
        %v334 = vrot.slane %v332, 4
        %v335 = vshll.u32 %v248, 16
        %v337 = vrot.slane %v335, 5
        %v338 = vor.u32 %v334, %v337
        %v339 = vrot.slane %v338, 4
        %v341 = vshll.u32 %v249, 16
        %v343 = vrot.slane %v341, 5
        %v344 = vsel %vm260, %v339, %v343
        %v346 = vshrl.u32 %v250, 16
        %v348 = vrot.slane %v346, 4
        %v349 = vshll.u32 %v250, 16
        %v351 = vrot.slane %v349, 5
        %v352 = vor.u32 %v348, %v351
        %v353 = vrot.slane %v352, 4
        %v355 = vshll.u32 %v251, 16
        %v357 = vrot.slane %v355, 5
        %v358 = vsel %vm260, %v353, %v357
        %v360 = vshrl.u32 %v252, 16
        %v362 = vrot.slane %v360, 4
        %v363 = vshll.u32 %v252, 16
        %v365 = vrot.slane %v363, 5
        %v366 = vor.u32 %v362, %v365
        %v367 = vrot.slane %v366, 4
        %v369 = vshll.u32 %v253, 16
        %v371 = vrot.slane %v369, 5
        %v372 = vsel %vm260, %v367, %v371
        %vm389 = vcmask 1042432
        %vm390 = vcmask 1046532
        %vm391 = vmor %vm389, %vm390
        %v392 = vrot.slane %v238, 5
        %v393 = vrot.slane %v392, 4
        %v394 = vrot.slane %v239, 5
        %v395 = vsel %vm391, %v393, %v394
        %v396 = vrot.slane %v240, 5
        %v397 = vrot.slane %v396, 4
        %v398 = vrot.slane %v241, 5
        %v399 = vsel %vm391, %v397, %v398
        %v400 = vrot.slane %v242, 5
        %v401 = vrot.slane %v400, 4
        %v402 = vrot.slane %v243, 5
        %v403 = vsel %vm391, %v401, %v402
        %v404 = vrot.slane %v244, 5
        %v405 = vrot.slane %v404, 4
        %v406 = vrot.slane %v245, 5
        %v407 = vsel %vm391, %v405, %v406
        %v408 = vrot.slane %v246, 5
        %v409 = vrot.slane %v408, 4
        %v410 = vrot.slane %v247, 5
        %v411 = vsel %vm391, %v409, %v410
        %v412 = vrot.slane %v248, 5
        %v413 = vrot.slane %v412, 4
        %v414 = vrot.slane %v249, 5
        %v415 = vsel %vm391, %v413, %v414
        %v416 = vrot.slane %v250, 5
        %v417 = vrot.slane %v416, 4
        %v418 = vrot.slane %v251, 5
        %v419 = vsel %vm391, %v417, %v418
        %v420 = vrot.slane %v252, 5
        %v421 = vrot.slane %v420, 4
        %v422 = vrot.slane %v253, 5
        %v423 = vsel %vm391, %v421, %v422
        %v425 = vshrl.u32 %v254, 16
        %v427 = vrot.slane %v425, 4
        %v428 = vshll.u32 %v254, 16
        %v430 = vrot.slane %v428, 5
        %v431 = vor.u32 %v427, %v430
        %v432 = vrot.slane %v431, 4
        %v434 = vshll.u32 %v255, 16
        %v436 = vrot.slane %v434, 5
        %v437 = vsel %vm260, %v432, %v436
        %v440 = vrot.slane %v254, 5
        %v441 = vrot.slane %v440, 4
        %v442 = vrot.slane %v255, 5
        %v443 = vsel %vm391, %v441, %v442
        %v445 = vshrl.u32 %v256, 16
        %v447 = vrot.slane %v445, 4
        %v448 = vshll.u32 %v256, 16
        %v450 = vrot.slane %v448, 5
        %v451 = vor.u32 %v447, %v450
        %v452 = vrot.slane %v451, 4
        %v454 = vshll.u32 %v257, 16
        %v456 = vrot.slane %v454, 5
        %v457 = vsel %vm260, %v452, %v456
        %v460 = vrot.slane %v256, 5
        %v461 = vrot.slane %v460, 4
        %v462 = vrot.slane %v257, 5
        %v463 = vsel %vm391, %v461, %v462
        %v464 = vunpack.c.l.b16 %v238
        %v465 = vunpack.c.l.b16 %v240
        %v466 = vunpack.c.l.b16 %v242
        %v467 = vunpack.c.l.b16 %v244
        %v468 = vunpack.c.l.b16 %v246
        %v469 = vunpack.c.l.b16 %v248
        %v470 = vunpack.c.l.b16 %v250
        %v471 = vunpack.c.l.b16 %v252
        %v472 = vpack.c.b16 %v465, %v464
        %v473 = vpack.c.b16 %v467, %v466
        %v474 = vpack.c.b16 %v469, %v468
        %v475 = vpack.c.b16 %v471, %v470
        %v480 = vunpack.c.l.b16 %v274
        %v481 = vunpack.c.l.b16 %v288
        %v482 = vunpack.c.l.b16 %v302
        %v483 = vunpack.c.l.b16 %v316
        %v484 = vunpack.c.l.b16 %v330
        %v485 = vunpack.c.l.b16 %v344
        %v486 = vunpack.c.l.b16 %v358
        %v487 = vunpack.c.l.b16 %v372
        %v488 = vpack.c.b16 %v481, %v480
        %v489 = vpack.c.b16 %v483, %v482
        %v490 = vpack.c.b16 %v485, %v484
        %v491 = vpack.c.b16 %v487, %v486
        %v496 = vunpack.c.l.b16 %v395
        %v497 = vunpack.c.l.b16 %v399
        %v498 = vunpack.c.l.b16 %v403
        %v499 = vunpack.c.l.b16 %v407
        %v500 = vunpack.c.l.b16 %v411
        %v501 = vunpack.c.l.b16 %v415
        %v502 = vunpack.c.l.b16 %v419
        %v503 = vunpack.c.l.b16 %v423
        %v504 = vpack.c.b16 %v497, %v496
        %v505 = vpack.c.b16 %v499, %v498
        %v506 = vpack.c.b16 %v501, %v500
        %v507 = vpack.c.b16 %v503, %v502
        %v512 = vunpack.c.l.b16 %v254
        %v513 = vpack.c.b16 %v466, %v465
        %v514 = vpack.c.b16 %v468, %v467
        %v515 = vpack.c.b16 %v470, %v469
        %v516 = vpack.c.b16 %v512, %v471
        %v521 = vunpack.c.l.b16 %v437
        %v522 = vpack.c.b16 %v482, %v481
        %v523 = vpack.c.b16 %v484, %v483
        %v524 = vpack.c.b16 %v486, %v485
        %v525 = vpack.c.b16 %v521, %v487
        %v530 = vunpack.c.l.b16 %v443
        %v531 = vpack.c.b16 %v498, %v497
        %v532 = vpack.c.b16 %v500, %v499
        %v533 = vpack.c.b16 %v502, %v501
        %v534 = vpack.c.b16 %v530, %v503
        %v539 = vunpack.c.l.b16 %v256
        %v540 = vpack.c.b16 %v539, %v512
        %v542 = vunpack.c.l.b16 %v457
        %v543 = vpack.c.b16 %v542, %v521
        %v545 = vunpack.c.l.b16 %v463
        %v546 = vpack.c.b16 %v545, %v530
        %v548 = vld [vmem:[%s233] sm:$0xf]
        %v549 = vld [vmem:[%s233 + $0x4] sm:$0xf]
        %v550 = vld [vmem:[%s233 + $0x8] sm:$0xf]
        %v551 = vld [vmem:[%s233 + $0xc] sm:$0xf]
        %v552 = vld [vmem:[%s233 + $0x10] sm:$0xf]
        %v553 = vld [vmem:[%s233 + $0x14] sm:$0xf]
        %v554 = vld [vmem:[%s233 + $0x18] sm:$0xf]
        %v555 = vld [vmem:[%s233 + $0x1c] sm:$0xf]
        %v556 = vld [vmem:[%s233 + $0x20] sm:$0xf]
        %v557 = vld [vmem:[%s233 + $0x24] sm:$0xf]
        %v558 = vld [vmem:[%s233 + $0x28] sm:$0xf]
        %v559 = vld [vmem:[%s233 + $0x2c] sm:$0xf]
        %v560 = vld [vmem:[%s233 + $0x30] sm:$0xf]
        %v561 = vld [vmem:[%s233 + $0x34] sm:$0xf]
        %v562 = vld [vmem:[%s233 + $0x38] sm:$0xf]
        %v563 = vld [vmem:[%s233 + $0x3c] sm:$0xf]
        %v564 = vld [vmem:[%s233 + $0x40] sm:$0xf]
        %v565 = vld [vmem:[%s233 + $0x44] sm:$0xf]
        %v566 = vld [vmem:[%s233 + $0x48] sm:$0xf]
        %v567 = vld [vmem:[%s233 + $0x4c] sm:$0xf]
        %v568 = vld [vmem:[%s233 + $0x50] sm:$0xf]
        %v569 = vld [vmem:[%s233 + $0x54] sm:$0xf]
        %v570 = vld [vmem:[%s233 + $0x58] sm:$0xf]
        %v571 = vld [vmem:[%s233 + $0x5c] sm:$0xf]
        %v572 = vld [vmem:[%s233 + $0x60] sm:$0xf]
        %v573 = vld [vmem:[%s233 + $0x64] sm:$0xf]
        %v574 = vld [vmem:[%s233 + $0x68] sm:$0xf]
        %v575 = vld [vmem:[%s233 + $0x6c] sm:$0xf]
        %v576 = vld [vmem:[%s233 + $0x70] sm:$0xf]
        %v577 = vld [vmem:[%s233 + $0x74] sm:$0xf]
        %v578 = vld [vmem:[%s233 + $0x78] sm:$0xf]
        %v579 = vld [vmem:[%s233 + $0x7c] sm:$0xf]
        %v580 = vld [vmem:[%s233 + $0x80] sm:$0xf]
        %v581 = vld [vmem:[%s233 + $0x84] sm:$0xf]
        %v582 = vld [vmem:[%s233 + $0x88] sm:$0xf]
        %v583 = vld [vmem:[%s233 + $0x8c] sm:$0xf]
        %v584 = vld [vmem:[%s233 + $0x90] sm:$0xf]
        %v585 = vld [vmem:[%s233 + $0x94] sm:$0xf]
        %v586 = vld [vmem:[%s233 + $0x98] sm:$0xf]
        %v587 = vld [vmem:[%s233 + $0x9c] sm:$0xf]
        %v588 = vld [vmem:[%s233 + $0xa0] sm:$0xf]
        %v589 = vld [vmem:[%s233 + $0xa4] sm:$0xf]
        %v590 = vld [vmem:[%s233 + $0xa8] sm:$0xf]
        %v591 = vld [vmem:[%s233 + $0xac] sm:$0xf]
        %v592 = vld [vmem:[%s233 + $0xb0] sm:$0xf]
        %v593 = vld [vmem:[%s233 + $0xb4] sm:$0xf]
        %v594 = vld [vmem:[%s233 + $0xb8] sm:$0xf]
        %v595 = vld [vmem:[%s233 + $0xbc] sm:$0xf]
        %v596 = vld [vmem:[%s233 + $0xc0] sm:$0xf]
        %v597 = vld [vmem:[%s233 + $0xc4] sm:$0xf]
        %v598 = vld [vmem:[%s233 + $0xc8] sm:$0xf]
        %v599 = vld [vmem:[%s233 + $0xcc] sm:$0xf]
        %v600 = vld [vmem:[%s233 + $0xd0] sm:$0xf]
        %v601 = vld [vmem:[%s233 + $0xd4] sm:$0xf]
        %v602 = vld [vmem:[%s233 + $0xd8] sm:$0xf]
        %v603 = vld [vmem:[%s233 + $0xdc] sm:$0xf]
        %v604 = vld [vmem:[%s233 + $0xe0] sm:$0xf]
        %v605 = vld [vmem:[%s233 + $0xe4] sm:$0xf]
        %v606 = vld [vmem:[%s233 + $0xe8] sm:$0xf]
        %v607 = vld [vmem:[%s233 + $0xec] sm:$0xf]
        %v608 = vld [vmem:[%s233 + $0xf0] sm:$0xf]
        %v609 = vld [vmem:[%s233 + $0xf4] sm:$0xf]
        %v610 = vld [vmem:[%s233 + $0xf8] sm:$0xf]
        %v611 = vld [vmem:[%s233 + $0xfc] sm:$0xf]
        %v612 = vld [vmem:[%s233 + $0x100] sm:$0xf]
        %v613 = vld [vmem:[%s233 + $0x104] sm:$0xf]
        %v614 = vld [vmem:[%s233 + $0x108] sm:$0xf]
        %v615 = vld [vmem:[%s233 + $0x10c] sm:$0xf]
        %v616 = vld [vmem:[%s233 + $0x110] sm:$0xf]
        %v617 = vld [vmem:[%s233 + $0x114] sm:$0xf]
        %v618 = vld [vmem:[%s233 + $0x118] sm:$0xf]
        %v619 = vld [vmem:[%s233 + $0x11c] sm:$0xf]
        %v620 = vld [vmem:[%s233 + $0x120] sm:$0xf]
        %v621 = vld [vmem:[%s233 + $0x124] sm:$0xf]
        %v622 = vld [vmem:[%s233 + $0x128] sm:$0xf]
        %v623 = vld [vmem:[%s233 + $0x12c] sm:$0xf]
        %v624 = vld [vmem:[%s233 + $0x130] sm:$0xf]
        %v625 = vld [vmem:[%s233 + $0x134] sm:$0xf]
        %v626 = vld [vmem:[%s233 + $0x138] sm:$0xf]
        %v627 = vld [vmem:[%s233 + $0x13c] sm:$0xf]
        %v628 = vld [vmem:[%s233 + $0x140] sm:$0xf]
        %v629 = vld [vmem:[%s233 + $0x144] sm:$0xf]
        %v630 = vld [vmem:[%s233 + $0x148] sm:$0xf]
        %v631 = vld [vmem:[%s233 + $0x14c] sm:$0xf]
        %v632 = vld [vmem:[%s233 + $0x150] sm:$0xf]
        %v633 = vld [vmem:[%s233 + $0x154] sm:$0xf]
        %v634 = vld [vmem:[%s233 + $0x158] sm:$0xf]
        %v635 = vld [vmem:[%s233 + $0x15c] sm:$0xf]
        %v636 = vld [vmem:[%s233 + $0x160] sm:$0xf]
        %v637 = vld [vmem:[%s233 + $0x164] sm:$0xf]
        %v638 = vld [vmem:[%s233 + $0x168] sm:$0xf]
        %v639 = vld [vmem:[%s233 + $0x16c] sm:$0xf]
        %v640 = vld [vmem:[%s233 + $0x170] sm:$0xf]
        %v641 = vld [vmem:[%s233 + $0x174] sm:$0xf]
        %v642 = vld [vmem:[%s233 + $0x178] sm:$0xf]
        %v643 = vld [vmem:[%s233 + $0x17c] sm:$0xf]
        %v644 = vld [vmem:[%s233 + $0x180] sm:$0xf]
        %v645 = vld [vmem:[%s233 + $0x184] sm:$0xf]
        %v646 = vld [vmem:[%s233 + $0x188] sm:$0xf]
        %v647 = vld [vmem:[%s233 + $0x18c] sm:$0xf]
        %v648 = vld [vmem:[%s233 + $0x190] sm:$0xf]
        %v649 = vld [vmem:[%s233 + $0x194] sm:$0xf]
        %v650 = vld [vmem:[%s233 + $0x198] sm:$0xf]
        %v651 = vld [vmem:[%s233 + $0x19c] sm:$0xf]
        %v652 = vld [vmem:[%s233 + $0x1a0] sm:$0xf]
        %v653 = vld [vmem:[%s233 + $0x1a4] sm:$0xf]
        %v654 = vld [vmem:[%s233 + $0x1a8] sm:$0xf]
        %v655 = vld [vmem:[%s233 + $0x1ac] sm:$0xf]
        %v656 = vld [vmem:[%s233 + $0x1b0] sm:$0xf]
        %v657 = vld [vmem:[%s233 + $0x1b4] sm:$0xf]
        %v658 = vld [vmem:[%s233 + $0x1b8] sm:$0xf]
        %v659 = vld [vmem:[%s233 + $0x1bc] sm:$0xf]
        %v660 = vld [vmem:[%s233 + $0x1c0] sm:$0xf]
        %v661 = vld [vmem:[%s233 + $0x1c4] sm:$0xf]
        %v662 = vld [vmem:[%s233 + $0x1c8] sm:$0xf]
        %v663 = vld [vmem:[%s233 + $0x1cc] sm:$0xf]
        %v664 = vld [vmem:[%s233 + $0x1d0] sm:$0xf]
        %v665 = vld [vmem:[%s233 + $0x1d4] sm:$0xf]
        %v666 = vld [vmem:[%s233 + $0x1d8] sm:$0xf]
        %v667 = vld [vmem:[%s233 + $0x1dc] sm:$0xf]
        %v668 = vld [vmem:[%s233 + $0x1e0] sm:$0xf]
        %v669 = vld [vmem:[%s233 + $0x1e4] sm:$0xf]
        %v670 = vld [vmem:[%s233 + $0x1e8] sm:$0xf]
        %v671 = vld [vmem:[%s233 + $0x1ec] sm:$0xf]
        %v672 = vld [vmem:[%s233 + $0x1f0] sm:$0xf]
        %v673 = vld [vmem:[%s233 + $0x1f4] sm:$0xf]
        %v674 = vld [vmem:[%s233 + $0x1f8] sm:$0xf]
        %v675 = vld [vmem:[%s233 + $0x1fc] sm:$0xf]
        %v676 = vld [vmem:[%s233 + $0x200] sm:$0xf]
        %v677 = vld [vmem:[%s233 + $0x204] sm:$0xf]
        %v678 = vld [vmem:[%s233 + $0x208] sm:$0xf]
        %v679 = vld [vmem:[%s233 + $0x20c] sm:$0xf]
        %v680 = vld [vmem:[%s233 + $0x210] sm:$0xf]
        %v681 = vld [vmem:[%s233 + $0x214] sm:$0xf]
        %v682 = vld [vmem:[%s233 + $0x218] sm:$0xf]
        %v683 = vld [vmem:[%s233 + $0x21c] sm:$0xf]
        %v684 = vld [vmem:[%s233 + $0x220] sm:$0xf]
        %v685 = vld [vmem:[%s233 + $0x224] sm:$0xf]
        %v686 = vld [vmem:[%s233 + $0x228] sm:$0xf]
        %v687 = vld [vmem:[%s233 + $0x22c] sm:$0xf]
        %v688 = vld [vmem:[%s233 + $0x230] sm:$0xf]
        %v689 = vld [vmem:[%s233 + $0x234] sm:$0xf]
        %v690 = vld [vmem:[%s233 + $0x238] sm:$0xf]
        %v691 = vld [vmem:[%s233 + $0x23c] sm:$0xf]
        %v692 = vld [vmem:[%s236] sm:$0x1]
        %v694 = vperm.slane %v692, 0
        %v840 = vunpack.c.l.b16 %v548
        %v841 = vunpack.c.l.b16 %v549
        %v842 = vunpack.c.l.b16 %v550
        %v843 = vunpack.c.l.b16 %v551
        %v844 = vunpack.c.l.b16 %v552
        %v845 = vunpack.c.l.b16 %v553
        %v846 = vunpack.c.l.b16 %v554
        %v847 = vunpack.c.l.b16 %v555
        %v848 = vunpack.c.l.b16 %v556
        %v849 = vunpack.c.l.b16 %v557
        %v850 = vunpack.c.l.b16 %v558
        %v851 = vunpack.c.l.b16 %v559
        %v852 = vunpack.c.l.b16 %v560
        %v853 = vunpack.c.l.b16 %v561
        %v854 = vunpack.c.l.b16 %v562
        %v855 = vunpack.c.l.b16 %v563
        %v856 = vunpack.c.l.b16 %v564
        %v857 = vunpack.c.l.b16 %v565
        %v858 = vunpack.c.l.b16 %v566
        %v859 = vunpack.c.l.b16 %v567
        %v860 = vunpack.c.l.b16 %v568
        %v861 = vunpack.c.l.b16 %v569
        %v862 = vunpack.c.l.b16 %v570
        %v863 = vunpack.c.l.b16 %v571
        %v864 = vunpack.c.l.b16 %v572
        %v865 = vunpack.c.l.b16 %v573
        %v866 = vunpack.c.l.b16 %v574
        %v867 = vunpack.c.l.b16 %v575
        %v868 = vunpack.c.l.b16 %v576
        %v869 = vunpack.c.l.b16 %v577
        %v870 = vunpack.c.l.b16 %v578
        %v871 = vunpack.c.l.b16 %v579
        %v872 = vunpack.c.l.b16 %v580
        %v873 = vunpack.c.l.b16 %v581
        %v874 = vunpack.c.l.b16 %v582
        %v875 = vunpack.c.l.b16 %v583
        %v876 = vunpack.c.l.b16 %v584
        %v877 = vunpack.c.l.b16 %v585
        %v878 = vunpack.c.l.b16 %v586
        %v879 = vunpack.c.l.b16 %v587
        %v880 = vunpack.c.l.b16 %v588
        %v881 = vunpack.c.l.b16 %v589
        %v882 = vunpack.c.l.b16 %v590
        %v883 = vunpack.c.l.b16 %v591
        %v884 = vunpack.c.l.b16 %v592
        %v885 = vunpack.c.l.b16 %v593
        %v886 = vunpack.c.l.b16 %v594
        %v887 = vunpack.c.l.b16 %v595
        %v888 = vunpack.c.l.b16 %v596
        %v889 = vunpack.c.l.b16 %v597
        %v890 = vunpack.c.l.b16 %v598
        %v891 = vunpack.c.l.b16 %v599
        %v892 = vunpack.c.l.b16 %v600
        %v893 = vunpack.c.l.b16 %v601
        %v894 = vunpack.c.l.b16 %v602
        %v895 = vunpack.c.l.b16 %v603
        %v896 = vunpack.c.l.b16 %v604
        %v897 = vunpack.c.l.b16 %v605
        %v898 = vunpack.c.l.b16 %v606
        %v899 = vunpack.c.l.b16 %v607
        %v900 = vunpack.c.l.b16 %v608
        %v901 = vunpack.c.l.b16 %v609
        %v902 = vunpack.c.l.b16 %v610
        %v903 = vunpack.c.l.b16 %v611
        %v904 = vunpack.c.l.b16 %v612
        %v905 = vunpack.c.l.b16 %v613
        %v906 = vunpack.c.l.b16 %v614
        %v907 = vunpack.c.l.b16 %v615
        %v908 = vunpack.c.l.b16 %v616
        %v909 = vunpack.c.l.b16 %v617
        %v910 = vunpack.c.l.b16 %v618
        %v911 = vunpack.c.l.b16 %v619
        %v912 = vunpack.c.l.b16 %v620
        %v913 = vunpack.c.l.b16 %v621
        %v914 = vunpack.c.l.b16 %v622
        %v915 = vunpack.c.l.b16 %v623
        %v916 = vunpack.c.l.b16 %v624
        %v917 = vunpack.c.l.b16 %v625
        %v918 = vunpack.c.l.b16 %v626
        %v919 = vunpack.c.l.b16 %v627
        %v920 = vunpack.c.l.b16 %v628
        %v921 = vunpack.c.l.b16 %v629
        %v922 = vunpack.c.l.b16 %v630
        %v923 = vunpack.c.l.b16 %v631
        %v924 = vunpack.c.l.b16 %v632
        %v925 = vunpack.c.l.b16 %v633
        %v926 = vunpack.c.l.b16 %v634
        %v927 = vunpack.c.l.b16 %v635
        %v928 = vunpack.c.l.b16 %v636
        %v929 = vunpack.c.l.b16 %v637
        %v930 = vunpack.c.l.b16 %v638
        %v931 = vunpack.c.l.b16 %v639
        %v932 = vunpack.c.l.b16 %v640
        %v933 = vunpack.c.l.b16 %v641
        %v934 = vunpack.c.l.b16 %v642
        %v935 = vunpack.c.l.b16 %v643
        %v936 = vunpack.c.l.b16 %v644
        %v937 = vunpack.c.l.b16 %v645
        %v938 = vunpack.c.l.b16 %v646
        %v939 = vunpack.c.l.b16 %v647
        %v940 = vunpack.c.l.b16 %v648
        %v941 = vunpack.c.l.b16 %v649
        %v942 = vunpack.c.l.b16 %v650
        %v943 = vunpack.c.l.b16 %v651
        %v944 = vunpack.c.l.b16 %v652
        %v945 = vunpack.c.l.b16 %v653
        %v946 = vunpack.c.l.b16 %v654
        %v947 = vunpack.c.l.b16 %v655
        %v948 = vunpack.c.l.b16 %v656
        %v949 = vunpack.c.l.b16 %v657
        %v950 = vunpack.c.l.b16 %v658
        %v951 = vunpack.c.l.b16 %v659
        %v952 = vunpack.c.l.b16 %v660
        %v953 = vunpack.c.l.b16 %v661
        %v954 = vunpack.c.l.b16 %v662
        %v955 = vunpack.c.l.b16 %v663
        %v956 = vunpack.c.l.b16 %v664
        %v957 = vunpack.c.l.b16 %v665
        %v958 = vunpack.c.l.b16 %v666
        %v959 = vunpack.c.l.b16 %v667
        %v960 = vunpack.c.l.b16 %v668
        %v961 = vunpack.c.l.b16 %v669
        %v962 = vunpack.c.l.b16 %v670
        %v963 = vunpack.c.l.b16 %v671
        %v964 = vunpack.c.l.b16 %v672
        %v965 = vunpack.c.l.b16 %v673
        %v966 = vunpack.c.l.b16 %v674
        %v967 = vunpack.c.l.b16 %v675
        %v968 = vunpack.c.l.b16 %v676
        %v969 = vunpack.c.l.b16 %v677
        %v970 = vunpack.c.l.b16 %v678
        %v971 = vunpack.c.l.b16 %v679
        %v972 = vunpack.c.l.b16 %v680
        %v973 = vunpack.c.l.b16 %v681
        %v974 = vunpack.c.l.b16 %v682
        %v975 = vunpack.c.l.b16 %v683
        %v976 = vunpack.c.l.b16 %v684
        %v977 = vunpack.c.l.b16 %v685
        %v978 = vunpack.c.l.b16 %v686
        %v979 = vunpack.c.l.b16 %v687
        %v980 = vunpack.c.l.b16 %v688
        %v981 = vunpack.c.l.b16 %v689
        %v982 = vunpack.c.l.b16 %v690
        %v983 = vunpack.c.l.b16 %v691
        %v984 = vpack.c.b16 %v841, %v840
        %v985 = vpack.c.b16 %v843, %v842
        %v986 = vpack.c.b16 %v845, %v844
        %v987 = vpack.c.b16 %v847, %v846
        %v988 = vpack.c.b16 %v849, %v848
        %v989 = vpack.c.b16 %v851, %v850
        %v990 = vpack.c.b16 %v853, %v852
        %v991 = vpack.c.b16 %v855, %v854
        %v992 = vpack.c.b16 %v857, %v856
        %v993 = vpack.c.b16 %v859, %v858
        %v994 = vpack.c.b16 %v861, %v860
        %v995 = vpack.c.b16 %v863, %v862
        %v996 = vpack.c.b16 %v865, %v864
        %v997 = vpack.c.b16 %v867, %v866
        %v998 = vpack.c.b16 %v869, %v868
        %v999 = vpack.c.b16 %v871, %v870
        %v1000 = vpack.c.b16 %v873, %v872
        %v1001 = vpack.c.b16 %v875, %v874
        %v1002 = vpack.c.b16 %v877, %v876
        %v1003 = vpack.c.b16 %v879, %v878
        %v1004 = vpack.c.b16 %v881, %v880
        %v1005 = vpack.c.b16 %v883, %v882
        %v1006 = vpack.c.b16 %v885, %v884
        %v1007 = vpack.c.b16 %v887, %v886
        %v1008 = vpack.c.b16 %v889, %v888
        %v1009 = vpack.c.b16 %v891, %v890
        %v1010 = vpack.c.b16 %v893, %v892
        %v1011 = vpack.c.b16 %v895, %v894
        %v1012 = vpack.c.b16 %v897, %v896
        %v1013 = vpack.c.b16 %v899, %v898
        %v1014 = vpack.c.b16 %v901, %v900
        %v1015 = vpack.c.b16 %v903, %v902
        %v1016 = vpack.c.b16 %v905, %v904
        %v1017 = vpack.c.b16 %v907, %v906
        %v1018 = vpack.c.b16 %v909, %v908
        %v1019 = vpack.c.b16 %v911, %v910
        %v1020 = vpack.c.b16 %v913, %v912
        %v1021 = vpack.c.b16 %v915, %v914
        %v1022 = vpack.c.b16 %v917, %v916
        %v1023 = vpack.c.b16 %v919, %v918
        %v1024 = vpack.c.b16 %v921, %v920
        %v1025 = vpack.c.b16 %v923, %v922
        %v1026 = vpack.c.b16 %v925, %v924
        %v1027 = vpack.c.b16 %v927, %v926
        %v1028 = vpack.c.b16 %v929, %v928
        %v1029 = vpack.c.b16 %v931, %v930
        %v1030 = vpack.c.b16 %v933, %v932
        %v1031 = vpack.c.b16 %v935, %v934
        %v1032 = vpack.c.b16 %v937, %v936
        %v1033 = vpack.c.b16 %v939, %v938
        %v1034 = vpack.c.b16 %v941, %v940
        %v1035 = vpack.c.b16 %v943, %v942
        %v1036 = vpack.c.b16 %v945, %v944
        %v1037 = vpack.c.b16 %v947, %v946
        %v1038 = vpack.c.b16 %v949, %v948
        %v1039 = vpack.c.b16 %v951, %v950
        %v1040 = vpack.c.b16 %v953, %v952
        %v1041 = vpack.c.b16 %v955, %v954
        %v1042 = vpack.c.b16 %v957, %v956
        %v1043 = vpack.c.b16 %v959, %v958
        %v1044 = vpack.c.b16 %v961, %v960
        %v1045 = vpack.c.b16 %v963, %v962
        %v1046 = vpack.c.b16 %v965, %v964
        %v1047 = vpack.c.b16 %v967, %v966
        %v1048 = vpack.c.b16 %v969, %v968
        %v1049 = vpack.c.b16 %v971, %v970
        %v1050 = vpack.c.b16 %v973, %v972
        %v1051 = vpack.c.b16 %v975, %v974
        %v1052 = vpack.c.b16 %v977, %v976
        %v1053 = vpack.c.b16 %v979, %v978
        %v1054 = vpack.c.b16 %v981, %v980
        %v1055 = vpack.c.b16 %v983, %v982
        %1128 = vmatpush.bf16.msra.mxu0 %v991
        %1129 = vmatpush.bf16.msra.mxu0 %v990
        %1130 = vmatpush.bf16.msra.mxu0 %v989
        %1131 = vmatpush.bf16.msra.mxu0 %v988
        %1132 = vmatpush.bf16.msra.mxu0 %v987
        %1133 = vmatpush.bf16.msra.mxu0 %v986
        %1134 = vmatpush.bf16.msra.mxu0 %v985
        %1135 = vmatpush.bf16.msra.mxu0 %v984
        %1136 = vmatmul.bf16.gmra.mxu0 %v472
        %v1137 = vpop.f32.mrf.mxu0
        %v1138 = vadd.f32 %v694, %v1137
        %v1139 = vpop.f32.mrf.mxu0
        %v1140 = vadd.f32 %v694, %v1139
        %1141 = vmatmul.bf16.gmra.mxu0 %v473
        %v1142 = vpop.f32.mrf.mxu0
        %v1143 = vadd.f32 %v694, %v1142
        %v1144 = vpop.f32.mrf.mxu0
        %v1145 = vadd.f32 %v694, %v1144
        %1146 = vmatmul.bf16.gmra.mxu0 %v474
        %v1147 = vpop.f32.mrf.mxu0
        %v1148 = vadd.f32 %v694, %v1147
        %v1149 = vpop.f32.mrf.mxu0
        %v1150 = vadd.f32 %v694, %v1149
        %1151 = vmatmul.bf16.gmra.mxu0 %v475
        %v1152 = vpop.f32.mrf.mxu0
        %v1153 = vadd.f32 %v694, %v1152
        %v1154 = vpop.f32.mrf.mxu0
        %v1155 = vadd.f32 %v694, %v1154
        %1156 = vdwg.mxu0
        %1157 = vmatpush.bf16.msra.mxu0 %v999
        %1158 = vmatpush.bf16.msra.mxu0 %v998
        %1159 = vmatpush.bf16.msra.mxu0 %v997
        %1160 = vmatpush.bf16.msra.mxu0 %v996
        %1161 = vmatpush.bf16.msra.mxu0 %v995
        %1162 = vmatpush.bf16.msra.mxu0 %v994
        %1163 = vmatpush.bf16.msra.mxu0 %v993
        %1164 = vmatpush.bf16.msra.mxu0 %v992
        %1165 = vmatmul.bf16.gmra.mxu0 %v488
        %v1166 = vpop.f32.mrf.mxu0
        %v1167 = vadd.f32 %v1138, %v1166
        %v1168 = vpop.f32.mrf.mxu0
        %v1169 = vadd.f32 %v1140, %v1168
        %1170 = vmatmul.bf16.gmra.mxu0 %v489
        %v1171 = vpop.f32.mrf.mxu0
        %v1172 = vadd.f32 %v1143, %v1171
        %v1173 = vpop.f32.mrf.mxu0
        %v1174 = vadd.f32 %v1145, %v1173
        %1175 = vmatmul.bf16.gmra.mxu0 %v490
        %v1176 = vpop.f32.mrf.mxu0
        %v1177 = vadd.f32 %v1148, %v1176
        %v1178 = vpop.f32.mrf.mxu0
        %v1179 = vadd.f32 %v1150, %v1178
        %1180 = vmatmul.bf16.gmra.mxu0 %v491
        %v1181 = vpop.f32.mrf.mxu0
        %v1182 = vadd.f32 %v1153, %v1181
        %v1183 = vpop.f32.mrf.mxu0
        %v1184 = vadd.f32 %v1155, %v1183
        %1185 = vdwg.mxu0
        %1186 = vmatpush.bf16.msra.mxu0 %v1007
        %1187 = vmatpush.bf16.msra.mxu0 %v1006
        %1188 = vmatpush.bf16.msra.mxu0 %v1005
        %1189 = vmatpush.bf16.msra.mxu0 %v1004
        %1190 = vmatpush.bf16.msra.mxu0 %v1003
        %1191 = vmatpush.bf16.msra.mxu0 %v1002
        %1192 = vmatpush.bf16.msra.mxu0 %v1001
        %1193 = vmatpush.bf16.msra.mxu0 %v1000
        %1194 = vmatmul.bf16.gmra.mxu0 %v504
        %v1195 = vpop.f32.mrf.mxu0
        %v1196 = vadd.f32 %v1167, %v1195
        %v1197 = vpop.f32.mrf.mxu0
        %v1198 = vadd.f32 %v1169, %v1197
        %1199 = vmatmul.bf16.gmra.mxu0 %v505
        %v1200 = vpop.f32.mrf.mxu0
        %v1201 = vadd.f32 %v1172, %v1200
        %v1202 = vpop.f32.mrf.mxu0
        %v1203 = vadd.f32 %v1174, %v1202
        %1204 = vmatmul.bf16.gmra.mxu0 %v506
        %v1205 = vpop.f32.mrf.mxu0
        %v1206 = vadd.f32 %v1177, %v1205
        %v1207 = vpop.f32.mrf.mxu0
        %v1208 = vadd.f32 %v1179, %v1207
        %1209 = vmatmul.bf16.gmra.mxu0 %v507
        %v1210 = vpop.f32.mrf.mxu0
        %v1211 = vadd.f32 %v1182, %v1210
        %v1212 = vpop.f32.mrf.mxu0
        %v1213 = vadd.f32 %v1184, %v1212
        %1214 = vdwg.mxu0
        %1215 = vmatpush.bf16.msra.mxu0 %v1015
        %1216 = vmatpush.bf16.msra.mxu0 %v1014
        %1217 = vmatpush.bf16.msra.mxu0 %v1013
        %1218 = vmatpush.bf16.msra.mxu0 %v1012
        %1219 = vmatpush.bf16.msra.mxu0 %v1011
        %1220 = vmatpush.bf16.msra.mxu0 %v1010
        %1221 = vmatpush.bf16.msra.mxu0 %v1009
        %1222 = vmatpush.bf16.msra.mxu0 %v1008
        %1223 = vmatmul.bf16.gmra.mxu0 %v513
        %v1224 = vpop.f32.mrf.mxu0
        %v1225 = vadd.f32 %v1196, %v1224
        %v1226 = vpop.f32.mrf.mxu0
        %v1227 = vadd.f32 %v1198, %v1226
        %1228 = vmatmul.bf16.gmra.mxu0 %v514
        %v1229 = vpop.f32.mrf.mxu0
        %v1230 = vadd.f32 %v1201, %v1229
        %v1231 = vpop.f32.mrf.mxu0
        %v1232 = vadd.f32 %v1203, %v1231
        %1233 = vmatmul.bf16.gmra.mxu0 %v515
        %v1234 = vpop.f32.mrf.mxu0
        %v1235 = vadd.f32 %v1206, %v1234
        %v1236 = vpop.f32.mrf.mxu0
        %v1237 = vadd.f32 %v1208, %v1236
        %1238 = vmatmul.bf16.gmra.mxu0 %v516
        %v1239 = vpop.f32.mrf.mxu0
        %v1240 = vadd.f32 %v1211, %v1239
        %v1241 = vpop.f32.mrf.mxu0
        %v1242 = vadd.f32 %v1213, %v1241
        %1243 = vdwg.mxu0
        %1244 = vmatpush.bf16.msra.mxu0 %v1023
        %1245 = vmatpush.bf16.msra.mxu0 %v1022
        %1246 = vmatpush.bf16.msra.mxu0 %v1021
        %1247 = vmatpush.bf16.msra.mxu0 %v1020
        %1248 = vmatpush.bf16.msra.mxu0 %v1019
        %1249 = vmatpush.bf16.msra.mxu0 %v1018
        %1250 = vmatpush.bf16.msra.mxu0 %v1017
        %1251 = vmatpush.bf16.msra.mxu0 %v1016
        %1252 = vmatmul.bf16.gmra.mxu0 %v522
        %v1253 = vpop.f32.mrf.mxu0
        %v1254 = vadd.f32 %v1225, %v1253
        %v1255 = vpop.f32.mrf.mxu0
        %v1256 = vadd.f32 %v1227, %v1255
        %1257 = vmatmul.bf16.gmra.mxu0 %v523
        %v1258 = vpop.f32.mrf.mxu0
        %v1259 = vadd.f32 %v1230, %v1258
        %v1260 = vpop.f32.mrf.mxu0
        %v1261 = vadd.f32 %v1232, %v1260
        %1262 = vmatmul.bf16.gmra.mxu0 %v524
        %v1263 = vpop.f32.mrf.mxu0
        %v1264 = vadd.f32 %v1235, %v1263
        %v1265 = vpop.f32.mrf.mxu0
        %v1266 = vadd.f32 %v1237, %v1265
        %1267 = vmatmul.bf16.gmra.mxu0 %v525
        %v1268 = vpop.f32.mrf.mxu0
        %v1269 = vadd.f32 %v1240, %v1268
        %v1270 = vpop.f32.mrf.mxu0
        %v1271 = vadd.f32 %v1242, %v1270
        %1272 = vdwg.mxu0
        %1273 = vmatpush.bf16.msra.mxu0 %v1031
        %1274 = vmatpush.bf16.msra.mxu0 %v1030
        %1275 = vmatpush.bf16.msra.mxu0 %v1029
        %1276 = vmatpush.bf16.msra.mxu0 %v1028
        %1277 = vmatpush.bf16.msra.mxu0 %v1027
        %1278 = vmatpush.bf16.msra.mxu0 %v1026
        %1279 = vmatpush.bf16.msra.mxu0 %v1025
        %1280 = vmatpush.bf16.msra.mxu0 %v1024
        %1281 = vmatmul.bf16.gmra.mxu0 %v531
        %v1282 = vpop.f32.mrf.mxu0
        %v1283 = vadd.f32 %v1254, %v1282
        %v1284 = vpop.f32.mrf.mxu0
        %v1285 = vadd.f32 %v1256, %v1284
        %1286 = vmatmul.bf16.gmra.mxu0 %v532
        %v1287 = vpop.f32.mrf.mxu0
        %v1288 = vadd.f32 %v1259, %v1287
        %v1289 = vpop.f32.mrf.mxu0
        %v1290 = vadd.f32 %v1261, %v1289
        %1291 = vmatmul.bf16.gmra.mxu0 %v533
        %v1292 = vpop.f32.mrf.mxu0
        %v1293 = vadd.f32 %v1264, %v1292
        %v1294 = vpop.f32.mrf.mxu0
        %v1295 = vadd.f32 %v1266, %v1294
        %1296 = vmatmul.bf16.gmra.mxu0 %v534
        %v1297 = vpop.f32.mrf.mxu0
        %v1298 = vadd.f32 %v1269, %v1297
        %v1299 = vpop.f32.mrf.mxu0
        %v1300 = vadd.f32 %v1271, %v1299
        %1301 = vdwg.mxu0
        %1302 = vmatpush.bf16.msra.mxu0 %v1039
        %1303 = vmatpush.bf16.msra.mxu0 %v1038
        %1304 = vmatpush.bf16.msra.mxu0 %v1037
        %1305 = vmatpush.bf16.msra.mxu0 %v1036
        %1306 = vmatpush.bf16.msra.mxu0 %v1035
        %1307 = vmatpush.bf16.msra.mxu0 %v1034
        %1308 = vmatpush.bf16.msra.mxu0 %v1033
        %1309 = vmatpush.bf16.msra.mxu0 %v1032
        %1310 = vmatmul.bf16.gmra.mxu0 %v473
        %v1311 = vpop.f32.mrf.mxu0
        %v1312 = vadd.f32 %v1283, %v1311
        %v1313 = vpop.f32.mrf.mxu0
        %v1314 = vadd.f32 %v1285, %v1313
        %1315 = vmatmul.bf16.gmra.mxu0 %v474
        %v1316 = vpop.f32.mrf.mxu0
        %v1317 = vadd.f32 %v1288, %v1316
        %v1318 = vpop.f32.mrf.mxu0
        %v1319 = vadd.f32 %v1290, %v1318
        %1320 = vmatmul.bf16.gmra.mxu0 %v475
        %v1321 = vpop.f32.mrf.mxu0
        %v1322 = vadd.f32 %v1293, %v1321
        %v1323 = vpop.f32.mrf.mxu0
        %v1324 = vadd.f32 %v1295, %v1323
        %1325 = vmatmul.bf16.gmra.mxu0 %v540
        %v1326 = vpop.f32.mrf.mxu0
        %v1327 = vadd.f32 %v1298, %v1326
        %v1328 = vpop.f32.mrf.mxu0
        %v1329 = vadd.f32 %v1300, %v1328
        %1330 = vdwg.mxu0
        %1331 = vmatpush.bf16.msra.mxu0 %v1047
        %1332 = vmatpush.bf16.msra.mxu0 %v1046
        %1333 = vmatpush.bf16.msra.mxu0 %v1045
        %1334 = vmatpush.bf16.msra.mxu0 %v1044
        %1335 = vmatpush.bf16.msra.mxu0 %v1043
        %1336 = vmatpush.bf16.msra.mxu0 %v1042
        %1337 = vmatpush.bf16.msra.mxu0 %v1041
        %1338 = vmatpush.bf16.msra.mxu0 %v1040
        %1339 = vmatmul.bf16.gmra.mxu0 %v489
        %v1340 = vpop.f32.mrf.mxu0
        %v1341 = vadd.f32 %v1312, %v1340
        %v1342 = vpop.f32.mrf.mxu0
        %v1343 = vadd.f32 %v1314, %v1342
        %1344 = vmatmul.bf16.gmra.mxu0 %v490
        %v1345 = vpop.f32.mrf.mxu0
        %v1346 = vadd.f32 %v1317, %v1345
        %v1347 = vpop.f32.mrf.mxu0
        %v1348 = vadd.f32 %v1319, %v1347
        %1349 = vmatmul.bf16.gmra.mxu0 %v491
        %v1350 = vpop.f32.mrf.mxu0
        %v1351 = vadd.f32 %v1322, %v1350
        %v1352 = vpop.f32.mrf.mxu0
        %v1353 = vadd.f32 %v1324, %v1352
        %1354 = vmatmul.bf16.gmra.mxu0 %v543
        %v1355 = vpop.f32.mrf.mxu0
        %v1356 = vadd.f32 %v1327, %v1355
        %v1357 = vpop.f32.mrf.mxu0
        %v1358 = vadd.f32 %v1329, %v1357
        %1359 = vdwg.mxu0
        %1360 = vmatpush.bf16.msra.mxu0 %v1055
        %1361 = vmatpush.bf16.msra.mxu0 %v1054
        %1362 = vmatpush.bf16.msra.mxu0 %v1053
        %1363 = vmatpush.bf16.msra.mxu0 %v1052
        %1364 = vmatpush.bf16.msra.mxu0 %v1051
        %1365 = vmatpush.bf16.msra.mxu0 %v1050
        %1366 = vmatpush.bf16.msra.mxu0 %v1049
        %1367 = vmatpush.bf16.msra.mxu0 %v1048
        %1368 = vmatmul.bf16.gmra.mxu0 %v505
        %v1369 = vpop.f32.mrf.mxu0
        %v1370 = vadd.f32 %v1341, %v1369
        %v1371 = vpop.f32.mrf.mxu0
        %v1372 = vadd.f32 %v1343, %v1371
        %1373 = vmatmul.bf16.gmra.mxu0 %v506
        %v1374 = vpop.f32.mrf.mxu0
        %v1375 = vadd.f32 %v1346, %v1374
        %v1376 = vpop.f32.mrf.mxu0
        %v1377 = vadd.f32 %v1348, %v1376
        %1378 = vmatmul.bf16.gmra.mxu0 %v507
        %v1379 = vpop.f32.mrf.mxu0
        %v1380 = vadd.f32 %v1351, %v1379
        %v1381 = vpop.f32.mrf.mxu0
        %v1382 = vadd.f32 %v1353, %v1381
        %1383 = vmatmul.bf16.gmra.mxu0 %v546
        %v1384 = vpop.f32.mrf.mxu0
        %v1385 = vadd.f32 %v1356, %v1384
        %v1386 = vpop.f32.mrf.mxu0
        %v1387 = vadd.f32 %v1358, %v1386
        %1388 = vdwg.mxu0
        %v1389 = vmax.f32 %v1370, 0.0
        %v1390 = vmax.f32 %v1372, 0.0
        %v1391 = vmax.f32 %v1375, 0.0
        %v1392 = vmax.f32 %v1377, 0.0
        %v1393 = vmax.f32 %v1380, 0.0
        %v1394 = vmax.f32 %v1382, 0.0
        %v1395 = vmax.f32 %v1385, 0.0
        %v1396 = vmax.f32 %v1387, 0.0
        %1397 = vst [vmem:[%s220] sm:$0xff] %v1389
        %1398 = vst [vmem:[%s220 + $0x8] sm:$0xff] %v1390
        %1399 = vst [vmem:[%s220 + $0x10] sm:$0xff] %v1391
        %1400 = vst [vmem:[%s220 + $0x18] sm:$0xff] %v1392
        %1401 = vst [vmem:[%s220 + $0x20] sm:$0xff] %v1393
        %1402 = vst [vmem:[%s220 + $0x28] sm:$0xff] %v1394
        %1403 = vst [vmem:[%s220 + $0x30] sm:$0xff] %v1395
        %1404 = vst [vmem:[%s220 + $0x38] sm:$0xff] %v1396
        %s1405 = sand.u32 %s128, 1
        %s1406 = scalar_lea.sflag [#allocation3], %s1405
        %s1407 = sand.u32 %s128, 1
        %s1408 = smul.addr %s1407, 64
        %s1409 = scalar_lea.vmem [#allocation2], %s1408
        // Predicated region
        $region33: #{down_forward.3} parent=31 // pred_check
          %p1410 = pneg %p138
        $region34: #{down_forward.3} parent=31 // pred_check_branch
          %1412 = sbr.rel (%p1410) target = $region36
        $region35: #{down_forward.3} parent=31 // pred_region
          %s1413 = smul.u32 8, %s23
          %1415 = vsyncadd %s1406, 0
          %s1416 = sadd.s32 %s24, %s1413
          %s1417 = smul.addr %s22, 8
          %s1418 = sadd.s32 %s1416, %s1417
          %s1419 = smul.addr %s1418, 8
          %s1420 = scalar_lea.hbm %s3, %s1419
          %s1421 = sshll.u32 %s1409, 4
          %s1422 = int_to_ptr.vmem [resolvable:$true] %s1421
          %s1423 = sshll.u32 %s1420, 4
          %s1424 = int_to_ptr.hbm [resolvable:$true] %s1423
          %1429 = dma.vmem_to_hbm [thread:$0]  %s1422, 1024, %s1424, %s1406, 128, 128, 8
        $region36: #{down_forward.3} parent=31 // pred_fallthru
          _
      $region32: #{down_forward.3} parent=5 // pred_fallthru
        _
      %p1430 = scmp.le.s32.totalorder 2, %s12
      // Predicated region
      $region37: #{down_forward.3} parent=5 // pred_check
        %p1431 = pneg %p1430
      $region38: #{down_forward.3} parent=5 // pred_check_branch
        %1433 = sbr.rel (%p1431) target = $region40
      $region39: #{down_forward.3} parent=5 // pred_region
        %s1434 = ssub.s32 %s12, 2
        // Predicated region
        $region41: #{down_forward.3} parent=39 // pred_check
          %p1435 = pneg %p144
        $region42: #{down_forward.3} parent=39 // pred_check_branch
          %1437 = sbr.rel (%p1435) target = $region44
        $region43: #{down_forward.3} parent=39 // pred_region
          %s1438 = sand.u32 %s129, 1
          %s1439 = scalar_lea.sflag [#allocation3], %s1438
          %s1440 = sand.u32 %s129, 1
          %s1441 = smul.addr %s1440, 64
          %s1442 = scalar_lea.vmem [#allocation2], %s1441
          %1444 = dma.done %s1439, 1024
        $region44: #{down_forward.3} parent=39 // pred_fallthru
          _
      $region40: #{down_forward.3} parent=5 // pred_fallthru
        _
    $region6: #{down_forward.3} parent=1 // loop_footer
      %s16 = sadd.s32 1, %s12
    $region7: #{down_forward.3} parent=1 // loop_footer_branch
      %11 = sbr.rel target = $region3
    $region8: #{down_forward.3} parent=1 // loop_exit
      _
    %1445 = vsyncpa [#allocation3], 1
    %s1446 = scalar_lea.sflag [#allocation3], 1
    %1447 = vsyncpa %s1446, 1

</llo_original>
